<compile_context>
chip_gen: v7x
topology: tpu7x:2x2x1
jax: 0.10.0
libtpu: 0.0.40
codegen_flags: <defaults>
</compile_context>

<pallas_src>
import functools

import jax
import jax.numpy as jnp
from jax import lax
from jax.experimental import pallas as pl
from jax.experimental.pallas import tpu as pltpu


# ---------------------------------------------------------------------------
# Kernel factory: layout / sizes are static Python, closed over by the body.
# ---------------------------------------------------------------------------
def _make_kernel(layout, two_n, two_e, num_graphs):
    f32 = jnp.float32

    def kernel(x_ref, ea_ref, src_ref, tgt_ref, pool_ref, p_ref, eps_ref, out_ref):
        def param(name):
            r0, r, c = layout[name]
            return p_ref[r0:r0 + r, :c]          # static slice of the packed slab

        x = x_ref[...]                            # (2N, node_dim)
        ea = ea_ref[...]                          # (2E, edge_dim)

        # ---- gather / scatter / pool matrices built in VMEM from indices ----
        src = src_ref[...]                        # (2E, 1) int32
        tgt = tgt_ref[...]                        # (1, 2E) int32
        n_iota_e = lax.broadcasted_iota(jnp.int32, (two_e, two_n), 1)
        src_oh = (n_iota_e == src).astype(f32)    # (2E, 2N)  edge -> source node
        n_iota_n = lax.broadcasted_iota(jnp.int32, (two_n, two_e), 0)
        tgt_oh = (n_iota_n == tgt).astype(f32)    # (2N, 2E)  scatter-add to target

        g_iota = lax.broadcasted_iota(jnp.int32, (num_graphs, two_n), 0)
        memb1 = (g_iota == pool_ref[0:1, :]).astype(f32)   # (B, 2N) graph-1 nodes
        memb2 = (g_iota == pool_ref[1:2, :]).astype(f32)   # (B, 2N) graph-2 nodes
        pool1 = memb1 / jnp.maximum(jnp.sum(memb1, axis=1, keepdims=True), 1.0)
        pool2 = memb2 / jnp.maximum(jnp.sum(memb2, axis=1, keepdims=True), 1.0)

        eps0 = eps_ref[0]                         # SMEM scalar reads
        eps1 = eps_ref[1]

        def gine(h, We, be, Wa, ba, Wb, bb, eps):
            # GINEConv: nn((1 + eps) * x_i + sum_{j->i} relu(x_j + lin_e(e_ij)))
            e = jnp.dot(ea, We, preferred_element_type=f32) + be        # (2E, d)
            xj = jnp.dot(src_oh, h, preferred_element_type=f32)         # (2E, d)
            m = jnp.maximum(xj + e, 0.0)
            agg = jnp.dot(tgt_oh, m, preferred_element_type=f32)        # (2N, d)
            z = (1.0 + eps) * h + agg
            z = jnp.maximum(jnp.dot(z, Wa, preferred_element_type=f32) + ba, 0.0)
            return jnp.dot(z, Wb, preferred_element_type=f32) + bb

        # Shared-weight embedder, one block-diagonal pass over both graphs.
        h = gine(x, param("We0"), param("be0"), param("W0a"), param("b0a"),
                 param("W0b"), param("b0b"), eps0)
        h = h + gine(h, param("We1"), param("be1"), param("W1a"), param("b1a"),
                     param("W1b"), param("b1b"), eps1)

        e1 = jnp.dot(pool1, h, preferred_element_type=f32)   # (B, H)  graph-1 embeds
        e2 = jnp.dot(pool2, h, preferred_element_type=f32)   # (B, H)  graph-2 embeds

        # lin_out(cat([e1, e2], -1)) with Wc1 pre-split on the host.
        z = (jnp.dot(e1, param("Wc1a"), preferred_element_type=f32)
             + jnp.dot(e2, param("Wc1b"), preferred_element_type=f32)
             + param("bc1"))
        z = jnp.maximum(z, 0.0)
        z = jnp.dot(z, param("Wc2"), preferred_element_type=f32) + param("bc2")

        # torch .squeeze(1) is a no-op (dim 1 has size 2); softmax over dim=1.
        z = z - jnp.max(z, axis=-1, keepdims=True)
        ez = jnp.exp(z)
        inv = pl.reciprocal(jnp.sum(ez, axis=-1, keepdims=True), approx=False)
        out_ref[...] = ez * inv

    return kernel


# ---------------------------------------------------------------------------
# Pack all weights/biases into one f32 slab (8-row-aligned pieces) + eps array.
# ---------------------------------------------------------------------------
def _pack_params(params, hidden):
    (We0, be0, W0a, b0a, W0b, b0b, eps0,
     We1, be1, W1a, b1a, W1b, b1b, eps1,
     Wc1, bc1, Wc2, bc2) = params
    pieces = [
        ("We0", We0), ("be0", be0), ("W0a", W0a), ("b0a", b0a),
        ("W0b", W0b), ("b0b", b0b),
        ("We1", We1), ("be1", be1), ("W1a", W1a), ("b1a", b1a),
        ("W1b", W1b), ("b1b", b1b),
        ("Wc1a", Wc1[:hidden]), ("Wc1b", Wc1[hidden:]),
        ("bc1", bc1), ("Wc2", Wc2), ("bc2", bc2),
    ]
    lane = max(int(m.shape[1]) for _, m in pieces)
    layout, blocks, row = {}, [], 0
    for name, m in pieces:
        r, c = int(m.shape[0]), int(m.shape[1])
        rpad = -(-r // 8) * 8                      # keep sub-block starts 8-aligned
        layout[name] = (row, r, c)
        blk = jnp.zeros((rpad, lane), jnp.float32).at[:r, :c].set(
            m.astype(jnp.float32))
        blocks.append(blk)
        row += rpad
    slab = jnp.concatenate(blocks, axis=0)          # one parameter DMA
    eps = jnp.stack([jnp.reshape(eps0, ()),
                     jnp.reshape(eps1, ())]).astype(jnp.float32)
    return slab, eps, layout


# ---------------------------------------------------------------------------
# Jitted wrapper: concat graphs, build index arrays, launch the fused kernel.
# ---------------------------------------------------------------------------
@functools.partial(jax.jit, static_argnames=("num_graphs",))
def graph_classifier(x1, edge_index1, edge_attr1, batch1,
                     x2, edge_index2, edge_attr2, batch2,
                     params, num_graphs):
    n1, n2 = x1.shape[0], x2.shape[0]
    e1n, e2n = edge_attr1.shape[0], edge_attr2.shape[0]
    two_n, two_e = n1 + n2, e1n + e2n
    hidden = params[4].shape[0]                     # W0b is (hidden, hidden)

    # Scaling guard: dense one-hot message passing is O(E*N) f32 in VMEM;
    # it would exceed v7x's 64 MiB VMEM first.  Larger graphs need a
    # tiled / DMA-gather formulation instead of this fully-fused kernel.
    dense_bytes = 4 * 3 * two_e * two_n
    assert dense_bytes < (8 << 20), "graph too large for the dense one-hot kernel"

    # One shared-weight block-diagonal pass over both graphs.
    x_cat = jnp.concatenate([x1, x2], axis=0).astype(jnp.float32)      # (2N, C)
    ea_cat = jnp.concatenate([edge_attr1, edge_attr2], 0).astype(jnp.float32)
    src = jnp.concatenate([edge_index1[0], edge_index2[0] + n1]).astype(jnp.int32)
    tgt = jnp.concatenate([edge_index1[1], edge_index2[1] + n1]).astype(jnp.int32)
    src_col = src[:, None]                                             # (2E, 1)
    tgt_row = tgt[None, :]                                             # (1, 2E)
    pool_rows = jnp.stack([                                            # (2, 2N)
        jnp.concatenate([batch1.astype(jnp.int32),
                         jnp.full((n2,), -1, jnp.int32)]),
        jnp.concatenate([jnp.full((n1,), -1, jnp.int32),
                         batch2.astype(jnp.int32)]),
    ])

    slab, eps, layout = _pack_params(params, hidden)
    kernel = _make_kernel(layout, two_n, two_e, num_graphs)

    vm = pl.BlockSpec(memory_space=pltpu.MemorySpace.VMEM)
    sm = pl.BlockSpec(memory_space=pltpu.MemorySpace.SMEM)
    return pl.pallas_call(
        kernel,
        out_shape=jax.ShapeDtypeStruct((num_graphs, 2), jnp.float32),
        in_specs=[vm, vm, vm, vm, vm, vm, sm],
        out_specs=vm,
        compiler_params=pltpu.CompilerParams(vmem_limit_bytes=32 * 1024 * 1024),
    )(x_cat, ea_cat, src_col, tgt_row, pool_rows, slab, eps)


# ---------------------------------------------------------------------------
# Pure-JAX reference (per-graph, un-batched, un-packed) for correctness check.
# ---------------------------------------------------------------------------
def _gine_ref(x, e_attr, src_oh, tgt_oh, We, be, Wa, ba, Wb, bb, eps):
    e = e_attr @ We + be
    xj = src_oh @ x
    m = jnp.maximum(xj + e, 0.0)
    agg = tgt_oh @ m
    h = (1.0 + eps) * x + agg
    h = jnp.maximum(h @ Wa + ba, 0.0)
    return h @ Wb + bb


def _prep_ref(x, edge_index, batch, num_graphs):
    n = x.shape[0]
    src_oh = jax.nn.one_hot(edge_index[0], n, dtype=jnp.float32)
    tgt_oh = jax.nn.one_hot(edge_index[1], n, dtype=jnp.float32).T
    memb = jax.nn.one_hot(batch, num_graphs, dtype=jnp.float32).T
    cnt = jnp.maximum(jnp.sum(memb, axis=1, keepdims=True), 1.0)
    return src_oh, tgt_oh, memb / cnt


def _embed_ref(x, ea, src_oh, tgt_oh, pool, p):
    (We0, be0, W0a, b0a, W0b, b0b, eps0,
     We1, be1, W1a, b1a, W1b, b1b, eps1) = p
    h = _gine_ref(x, ea, src_oh, tgt_oh, We0, be0, W0a, b0a, W0b, b0b, eps0)
    h = h + _gine_ref(h, ea, src_oh, tgt_oh, We1, be1, W1a, b1a, W1b, b1b, eps1)
    return pool @ h


def reference(x1, ei1, ea1, b1, x2, ei2, ea2, b2, params, num_graphs):
    (We0, be0, W0a, b0a, W0b, b0b, eps0,
     We1, be1, W1a, b1a, W1b, b1b, eps1,
     Wc1, bc1, Wc2, bc2) = params
    emb = (We0, be0, W0a, b0a, W0b, b0b, eps0[0, 0],
           We1, be1, W1a, b1a, W1b, b1b, eps1[0, 0])
    s1, t1, p1 = _prep_ref(x1, ei1, b1, num_graphs)
    s2, t2, p2 = _prep_ref(x2, ei2, b2, num_graphs)
    e1 = _embed_ref(x1, ea1, s1, t1, p1, emb)
    e2 = _embed_ref(x2, ea2, s2, t2, p2, emb)
    z = jnp.concatenate([e1, e2], axis=-1)
    z = jnp.maximum(z @ Wc1 + bc1, 0.0)
    z = z @ Wc2 + bc2
    return jax.nn.softmax(z, axis=1)


# ---------------------------------------------------------------------------
# Deterministic synthetic parameters (shapes from GraphClassifier.__init__).
# ---------------------------------------------------------------------------
def init_params(key, hidden, node_dim, edge_dim):
    ks = jax.random.split(key, 20)
    lin = lambda k, i, o: 0.1 * jax.random.normal(k, (i, o), jnp.float32)
    vec = lambda k, o: 0.1 * jax.random.normal(k, (1, o), jnp.float32)
    # GINE layer 0 (in = node_dim)
    We0, be0 = lin(ks[0], edge_dim, node_dim), vec(ks[1], node_dim)
    W0a, b0a = lin(ks[2], node_dim, hidden), vec(ks[3], hidden)
    W0b, b0b = lin(ks[4], hidden, hidden), vec(ks[5], hidden)
    eps0 = jnp.array([[0.10]], jnp.float32)
    # GINE layer 1 (in = hidden)
    We1, be1 = lin(ks[6], edge_dim, hidden), vec(ks[7], hidden)
    W1a, b1a = lin(ks[8], hidden, hidden), vec(ks[9], hidden)
    W1b, b1b = lin(ks[10], hidden, hidden), vec(ks[11], hidden)
    eps1 = jnp.array([[-0.05]], jnp.float32)
    # Classifier head: Linear(2H, 2H) -> ReLU -> Linear(2H, 2)
    Wc1, bc1 = lin(ks[12], 2 * hidden, 2 * hidden), vec(ks[13], 2 * hidden)
    Wc2, bc2 = lin(ks[14], 2 * hidden, 2), vec(ks[15], 2)
    return (We0, be0, W0a, b0a, W0b, b0b, eps0,
            We1, be1, W1a, b1a, W1b, b1b, eps1,
            Wc1, bc1, Wc2, bc2)


def make_graph(key, n_nodes, n_edges, node_dim, edge_dim, num_graphs):
    k = jax.random.split(key, 4)
    x = jax.random.normal(k[0], (n_nodes, node_dim), jnp.float32)
    ea = jax.random.normal(k[1], (n_edges, edge_dim), jnp.float32)
    per = n_nodes // num_graphs
    eper = n_edges // num_graphs
    src = jax.random.randint(k[2], (n_edges,), 0, per)
    tgt = jax.random.randint(k[3], (n_edges,), 0, per)
    offs = jnp.repeat(jnp.arange(num_graphs, dtype=jnp.int32) * per, eper)
    edge_index = jnp.stack([src + offs, tgt + offs]).astype(jnp.int32)
    batch = jnp.repeat(jnp.arange(num_graphs, dtype=jnp.int32), per)
    return x, edge_index, ea, batch


if __name__ == "__main__":
    hidden, node_dim, edge_dim = 32, 16, 8
    num_graphs, n_nodes, n_edges = 2, 16, 32

    key = jax.random.PRNGKey(0)
    kg1, kg2, kp = jax.random.split(key, 3)
    x1, ei1, ea1, b1 = make_graph(kg1, n_nodes, n_edges, node_dim, edge_dim, num_graphs)
    x2, ei2, ea2, b2 = make_graph(kg2, n_nodes, n_edges, node_dim, edge_dim, num_graphs)
    params = init_params(kp, hidden, node_dim, edge_dim)

    out = graph_classifier(x1, ei1, ea1, b1, x2, ei2, ea2, b2, params,
                           num_graphs=num_graphs)
    out = jax.block_until_ready(out)

    ref = reference(x1, ei1, ea1, b1, x2, ei2, ea2, b2, params, num_graphs)
    assert out.shape == (num_graphs, 2)
    assert jnp.allclose(jnp.sum(out, axis=-1), 1.0, atol=1e-4)
    assert jnp.allclose(out, ref, atol=1e-3, rtol=1e-3), (out, ref)
    print("KERNEL_OK")
</pallas_src>

<mosaic_0001>
module attributes {stable_mosaic.version = 11 : i64} {
  func.func @kernel(%arg0: memref<32x16xf32, #tpu.memory_space<vmem>>, %arg1: memref<64x8xf32, #tpu.memory_space<vmem>>, %arg2: memref<64x1xi32, #tpu.memory_space<vmem>>, %arg3: memref<1x64xi32, #tpu.memory_space<vmem>>, %arg4: memref<2x32xi32, #tpu.memory_space<vmem>>, %arg5: memref<320x64xf32, #tpu.memory_space<vmem>>, %arg6: memref<2xf32, #tpu.memory_space<smem>>, %arg7: memref<2x2xf32, #tpu.memory_space<vmem>>) attributes {dimension_semantics = [], scalar_prefetch = 0 : i64, scratch_operands = 0 : i64, tpu.core_type = #tpu.core_type<tc>} {
    %c0 = arith.constant 0 : index
    %c0_0 = arith.constant 0 : index
    %0 = vector.load %arg0[%c0, %c0_0] : memref<32x16xf32, #tpu.memory_space<vmem>>, vector<32x16xf32>
    %c0_1 = arith.constant 0 : index
    %c0_2 = arith.constant 0 : index
    %1 = vector.load %arg1[%c0_1, %c0_2] : memref<64x8xf32, #tpu.memory_space<vmem>>, vector<64x8xf32>
    %c0_3 = arith.constant 0 : index
    %c0_4 = arith.constant 0 : index
    %2 = vector.load %arg2[%c0_3, %c0_4] : memref<64x1xi32, #tpu.memory_space<vmem>>, vector<64x1xi32>
    %c0_5 = arith.constant 0 : index
    %c0_6 = arith.constant 0 : index
    %3 = vector.load %arg3[%c0_5, %c0_6] : memref<1x64xi32, #tpu.memory_space<vmem>>, vector<1x64xi32>
    %4 = tpu.iota {dimensions = array<i32: 1>} : vector<64x32xi32>
    %5 = vector.broadcast %2 : vector<64x1xi32> to vector<64x32xi32>
    %6 = arith.cmpi eq, %4, %5 : vector<64x32xi32>
    %7 = arith.extui %6 : vector<64x32xi1> to vector<64x32xi32>
    %8 = arith.sitofp %7 : vector<64x32xi32> to vector<64x32xf32>
    %9 = tpu.iota {dimensions = array<i32: 0>} : vector<32x64xi32>
    %10 = vector.broadcast %3 : vector<1x64xi32> to vector<32x64xi32>
    %11 = arith.cmpi eq, %9, %10 : vector<32x64xi32>
    %12 = arith.extui %11 : vector<32x64xi1> to vector<32x64xi32>
    %13 = arith.sitofp %12 : vector<32x64xi32> to vector<32x64xf32>
    %14 = tpu.iota {dimensions = array<i32: 0>} : vector<2x32xi32>
    %c0_7 = arith.constant 0 : index
    %c0_8 = arith.constant 0 : index
    %15 = vector.load %arg4[%c0_7, %c0_8] : memref<2x32xi32, #tpu.memory_space<vmem>>, vector<1x32xi32>
    %16 = vector.broadcast %15 : vector<1x32xi32> to vector<2x32xi32>
    %17 = arith.cmpi eq, %14, %16 : vector<2x32xi32>
    %18 = arith.extui %17 : vector<2x32xi1> to vector<2x32xi32>
    %19 = arith.sitofp %18 : vector<2x32xi32> to vector<2x32xf32>
    %c1 = arith.constant 1 : index
    %c0_9 = arith.constant 0 : index
    %20 = vector.load %arg4[%c1, %c0_9] : memref<2x32xi32, #tpu.memory_space<vmem>>, vector<1x32xi32>
    %21 = vector.broadcast %20 : vector<1x32xi32> to vector<2x32xi32>
    %22 = arith.cmpi eq, %14, %21 : vector<2x32xi32>
    %23 = arith.extui %22 : vector<2x32xi1> to vector<2x32xi32>
    %24 = arith.sitofp %23 : vector<2x32xi32> to vector<2x32xf32>
    %cst = arith.constant dense<0.000000e+00> : vector<2xf32>
    %25 = vector.multi_reduction <add>, %19, %cst [1] : vector<2x32xf32> to vector<2xf32>
    %26 = vector.shape_cast %25 : vector<2xf32> to vector<2x1xf32>
    %cst_10 = arith.constant 1.000000e+00 : f32
    %27 = vector.broadcast %cst_10 : f32 to vector<2x1xf32>
    %28 = arith.maximumf %26, %27 : vector<2x1xf32>
    %29 = vector.broadcast %28 : vector<2x1xf32> to vector<2x32xf32>
    %30 = arith.divf %19, %29 : vector<2x32xf32>
    %cst_11 = arith.constant dense<0.000000e+00> : vector<2xf32>
    %31 = vector.multi_reduction <add>, %24, %cst_11 [1] : vector<2x32xf32> to vector<2xf32>
    %32 = vector.shape_cast %31 : vector<2xf32> to vector<2x1xf32>
    %cst_12 = arith.constant 1.000000e+00 : f32
    %33 = vector.broadcast %cst_12 : f32 to vector<2x1xf32>
    %34 = arith.maximumf %32, %33 : vector<2x1xf32>
    %35 = vector.broadcast %34 : vector<2x1xf32> to vector<2x32xf32>
    %36 = arith.divf %24, %35 : vector<2x32xf32>
    %c0_13 = arith.constant 0 : index
    %37 = memref.load %arg6[%c0_13] : memref<2xf32, #tpu.memory_space<smem>>
    %c1_14 = arith.constant 1 : index
    %38 = memref.load %arg6[%c1_14] : memref<2xf32, #tpu.memory_space<smem>>
    %c0_15 = arith.constant 0 : index
    %c0_16 = arith.constant 0 : index
    %39 = vector.load %arg5[%c0_15, %c0_16] : memref<320x64xf32, #tpu.memory_space<vmem>>, vector<8x16xf32>
    %c8 = arith.constant 8 : index
    %c0_17 = arith.constant 0 : index
    %40 = vector.load %arg5[%c8, %c0_17] : memref<320x64xf32, #tpu.memory_space<vmem>>, vector<1x16xf32>
    %c16 = arith.constant 16 : index
    %c0_18 = arith.constant 0 : index
    %41 = vector.load %arg5[%c16, %c0_18] : memref<320x64xf32, #tpu.memory_space<vmem>>, vector<16x32xf32>
    %c32 = arith.constant 32 : index
    %c0_19 = arith.constant 0 : index
    %42 = vector.load %arg5[%c32, %c0_19] : memref<320x64xf32, #tpu.memory_space<vmem>>, vector<1x32xf32>
    %c40 = arith.constant 40 : index
    %c0_20 = arith.constant 0 : index
    %43 = vector.load %arg5[%c40, %c0_20] : memref<320x64xf32, #tpu.memory_space<vmem>>, vector<32x32xf32>
    %c72 = arith.constant 72 : index
    %c0_21 = arith.constant 0 : index
    %44 = vector.load %arg5[%c72, %c0_21] : memref<320x64xf32, #tpu.memory_space<vmem>>, vector<1x32xf32>
    %cst_22 = arith.constant dense<0.000000e+00> : vector<64x16xf32>
    %45 = tpu.matmul %1, %39, %cst_22 {dimension_numbers = #tpu.dot_dimension_numbers<[1], [0], [0], [1], [0, 0, 1, 1], [], []>} : vector<64x8xf32>, vector<8x16xf32>, vector<64x16xf32> -> vector<64x16xf32>
    %46 = vector.broadcast %40 : vector<1x16xf32> to vector<64x16xf32>
    %47 = arith.addf %45, %46 : vector<64x16xf32>
    %cst_23 = arith.constant dense<0.000000e+00> : vector<64x16xf32>
    %48 = tpu.matmul %8, %0, %cst_23 {dimension_numbers = #tpu.dot_dimension_numbers<[1], [0], [0], [1], [0, 0, 1, 1], [], []>} : vector<64x32xf32>, vector<32x16xf32>, vector<64x16xf32> -> vector<64x16xf32>
    %49 = arith.addf %48, %47 : vector<64x16xf32>
    %cst_24 = arith.constant 0.000000e+00 : f32
    %50 = vector.broadcast %cst_24 : f32 to vector<64x16xf32>
    %51 = arith.maximumf %49, %50 : vector<64x16xf32>
    %cst_25 = arith.constant dense<0.000000e+00> : vector<32x16xf32>
    %52 = tpu.matmul %13, %51, %cst_25 {dimension_numbers = #tpu.dot_dimension_numbers<[1], [0], [0], [1], [0, 0, 1, 1], [], []>} : vector<32x64xf32>, vector<64x16xf32>, vector<32x16xf32> -> vector<32x16xf32>
    %cst_26 = arith.constant 1.000000e+00 : f32
    %53 = arith.addf %cst_26, %37 : f32
    %54 = vector.broadcast %53 : f32 to vector<32x16xf32>
    %55 = arith.mulf %54, %0 : vector<32x16xf32>
    %56 = arith.addf %55, %52 : vector<32x16xf32>
    %cst_27 = arith.constant dense<0.000000e+00> : vector<32x32xf32>
    %57 = tpu.matmul %56, %41, %cst_27 {dimension_numbers = #tpu.dot_dimension_numbers<[1], [0], [0], [1], [0, 0, 1, 1], [], []>} : vector<32x16xf32>, vector<16x32xf32>, vector<32x32xf32> -> vector<32x32xf32>
    %58 = vector.broadcast %42 : vector<1x32xf32> to vector<32x32xf32>
    %59 = arith.addf %57, %58 : vector<32x32xf32>
    %cst_28 = arith.constant 0.000000e+00 : f32
    %60 = vector.broadcast %cst_28 : f32 to vector<32x32xf32>
    %61 = arith.maximumf %59, %60 : vector<32x32xf32>
    %cst_29 = arith.constant dense<0.000000e+00> : vector<32x32xf32>
    %62 = tpu.matmul %61, %43, %cst_29 {dimension_numbers = #tpu.dot_dimension_numbers<[1], [0], [0], [1], [0, 0, 1, 1], [], []>} : vector<32x32xf32>, vector<32x32xf32>, vector<32x32xf32> -> vector<32x32xf32>
    %63 = vector.broadcast %44 : vector<1x32xf32> to vector<32x32xf32>
    %64 = arith.addf %62, %63 : vector<32x32xf32>
    %c80 = arith.constant 80 : index
    %c0_30 = arith.constant 0 : index
    %65 = vector.load %arg5[%c80, %c0_30] : memref<320x64xf32, #tpu.memory_space<vmem>>, vector<8x32xf32>
    %c88 = arith.constant 88 : index
    %c0_31 = arith.constant 0 : index
    %66 = vector.load %arg5[%c88, %c0_31] : memref<320x64xf32, #tpu.memory_space<vmem>>, vector<1x32xf32>
    %c96 = arith.constant 96 : index
    %c0_32 = arith.constant 0 : index
    %67 = vector.load %arg5[%c96, %c0_32] : memref<320x64xf32, #tpu.memory_space<vmem>>, vector<32x32xf32>
    %c128 = arith.constant 128 : index
    %c0_33 = arith.constant 0 : index
    %68 = vector.load %arg5[%c128, %c0_33] : memref<320x64xf32, #tpu.memory_space<vmem>>, vector<1x32xf32>
    %c136 = arith.constant 136 : index
    %c0_34 = arith.constant 0 : index
    %69 = vector.load %arg5[%c136, %c0_34] : memref<320x64xf32, #tpu.memory_space<vmem>>, vector<32x32xf32>
    %c168 = arith.constant 168 : index
    %c0_35 = arith.constant 0 : index
    %70 = vector.load %arg5[%c168, %c0_35] : memref<320x64xf32, #tpu.memory_space<vmem>>, vector<1x32xf32>
    %cst_36 = arith.constant dense<0.000000e+00> : vector<64x32xf32>
    %71 = tpu.matmul %1, %65, %cst_36 {dimension_numbers = #tpu.dot_dimension_numbers<[1], [0], [0], [1], [0, 0, 1, 1], [], []>} : vector<64x8xf32>, vector<8x32xf32>, vector<64x32xf32> -> vector<64x32xf32>
    %72 = vector.broadcast %66 : vector<1x32xf32> to vector<64x32xf32>
    %73 = arith.addf %71, %72 : vector<64x32xf32>
    %cst_37 = arith.constant dense<0.000000e+00> : vector<64x32xf32>
    %74 = tpu.matmul %8, %64, %cst_37 {dimension_numbers = #tpu.dot_dimension_numbers<[1], [0], [0], [1], [0, 0, 1, 1], [], []>} : vector<64x32xf32>, vector<32x32xf32>, vector<64x32xf32> -> vector<64x32xf32>
    %75 = arith.addf %74, %73 : vector<64x32xf32>
    %cst_38 = arith.constant 0.000000e+00 : f32
    %76 = vector.broadcast %cst_38 : f32 to vector<64x32xf32>
    %77 = arith.maximumf %75, %76 : vector<64x32xf32>
    %cst_39 = arith.constant dense<0.000000e+00> : vector<32x32xf32>
    %78 = tpu.matmul %13, %77, %cst_39 {dimension_numbers = #tpu.dot_dimension_numbers<[1], [0], [0], [1], [0, 0, 1, 1], [], []>} : vector<32x64xf32>, vector<64x32xf32>, vector<32x32xf32> -> vector<32x32xf32>
    %cst_40 = arith.constant 1.000000e+00 : f32
    %79 = arith.addf %cst_40, %38 : f32
    %80 = vector.broadcast %79 : f32 to vector<32x32xf32>
    %81 = arith.mulf %80, %64 : vector<32x32xf32>
    %82 = arith.addf %81, %78 : vector<32x32xf32>
    %cst_41 = arith.constant dense<0.000000e+00> : vector<32x32xf32>
    %83 = tpu.matmul %82, %67, %cst_41 {dimension_numbers = #tpu.dot_dimension_numbers<[1], [0], [0], [1], [0, 0, 1, 1], [], []>} : vector<32x32xf32>, vector<32x32xf32>, vector<32x32xf32> -> vector<32x32xf32>
    %84 = vector.broadcast %68 : vector<1x32xf32> to vector<32x32xf32>
    %85 = arith.addf %83, %84 : vector<32x32xf32>
    %cst_42 = arith.constant 0.000000e+00 : f32
    %86 = vector.broadcast %cst_42 : f32 to vector<32x32xf32>
    %87 = arith.maximumf %85, %86 : vector<32x32xf32>
    %cst_43 = arith.constant dense<0.000000e+00> : vector<32x32xf32>
    %88 = tpu.matmul %87, %69, %cst_43 {dimension_numbers = #tpu.dot_dimension_numbers<[1], [0], [0], [1], [0, 0, 1, 1], [], []>} : vector<32x32xf32>, vector<32x32xf32>, vector<32x32xf32> -> vector<32x32xf32>
    %89 = vector.broadcast %70 : vector<1x32xf32> to vector<32x32xf32>
    %90 = arith.addf %88, %89 : vector<32x32xf32>
    %91 = arith.addf %64, %90 : vector<32x32xf32>
    %cst_44 = arith.constant dense<0.000000e+00> : vector<2x32xf32>
    %92 = tpu.matmul %30, %91, %cst_44 {dimension_numbers = #tpu.dot_dimension_numbers<[1], [0], [0], [1], [0, 0, 1, 1], [], []>} : vector<2x32xf32>, vector<32x32xf32>, vector<2x32xf32> -> vector<2x32xf32>
    %cst_45 = arith.constant dense<0.000000e+00> : vector<2x32xf32>
    %93 = tpu.matmul %36, %91, %cst_45 {dimension_numbers = #tpu.dot_dimension_numbers<[1], [0], [0], [1], [0, 0, 1, 1], [], []>} : vector<2x32xf32>, vector<32x32xf32>, vector<2x32xf32> -> vector<2x32xf32>
    %c176 = arith.constant 176 : index
    %c0_46 = arith.constant 0 : index
    %94 = vector.load %arg5[%c176, %c0_46] : memref<320x64xf32, #tpu.memory_space<vmem>>, vector<32x64xf32>
    %cst_47 = arith.constant dense<0.000000e+00> : vector<2x64xf32>
    %95 = tpu.matmul %92, %94, %cst_47 {dimension_numbers = #tpu.dot_dimension_numbers<[1], [0], [0], [1], [0, 0, 1, 1], [], []>} : vector<2x32xf32>, vector<32x64xf32>, vector<2x64xf32> -> vector<2x64xf32>
    %c208 = arith.constant 208 : index
    %c0_48 = arith.constant 0 : index
    %96 = vector.load %arg5[%c208, %c0_48] : memref<320x64xf32, #tpu.memory_space<vmem>>, vector<32x64xf32>
    %cst_49 = arith.constant dense<0.000000e+00> : vector<2x64xf32>
    %97 = tpu.matmul %93, %96, %cst_49 {dimension_numbers = #tpu.dot_dimension_numbers<[1], [0], [0], [1], [0, 0, 1, 1], [], []>} : vector<2x32xf32>, vector<32x64xf32>, vector<2x64xf32> -> vector<2x64xf32>
    %98 = arith.addf %95, %97 : vector<2x64xf32>
    %c240 = arith.constant 240 : index
    %c0_50 = arith.constant 0 : index
    %99 = vector.load %arg5[%c240, %c0_50] : memref<320x64xf32, #tpu.memory_space<vmem>>, vector<1x64xf32>
    %100 = vector.broadcast %99 : vector<1x64xf32> to vector<2x64xf32>
    %101 = arith.addf %98, %100 : vector<2x64xf32>
    %cst_51 = arith.constant 0.000000e+00 : f32
    %102 = vector.broadcast %cst_51 : f32 to vector<2x64xf32>
    %103 = arith.maximumf %101, %102 : vector<2x64xf32>
    %c248 = arith.constant 248 : index
    %c0_52 = arith.constant 0 : index
    %104 = vector.load %arg5[%c248, %c0_52] : memref<320x64xf32, #tpu.memory_space<vmem>>, vector<64x2xf32>
    %cst_53 = arith.constant dense<0.000000e+00> : vector<2x2xf32>
    %105 = tpu.matmul %103, %104, %cst_53 {dimension_numbers = #tpu.dot_dimension_numbers<[1], [0], [0], [1], [0, 0, 1, 1], [], []>} : vector<2x64xf32>, vector<64x2xf32>, vector<2x2xf32> -> vector<2x2xf32>
    %c312 = arith.constant 312 : index
    %c0_54 = arith.constant 0 : index
    %106 = vector.load %arg5[%c312, %c0_54] : memref<320x64xf32, #tpu.memory_space<vmem>>, vector<1x2xf32>
    %107 = vector.broadcast %106 : vector<1x2xf32> to vector<2x2xf32>
    %108 = arith.addf %105, %107 : vector<2x2xf32>
    %cst_55 = arith.constant dense<0xFF800000> : vector<2xf32>
    %109 = vector.multi_reduction <maximumf>, %108, %cst_55 [1] : vector<2x2xf32> to vector<2xf32>
    %110 = vector.shape_cast %109 : vector<2xf32> to vector<2x1xf32>
    %111 = vector.broadcast %110 : vector<2x1xf32> to vector<2x2xf32>
    %112 = arith.subf %108, %111 : vector<2x2xf32>
    %113 = math.exp %112 : vector<2x2xf32>
    %cst_56 = arith.constant dense<0.000000e+00> : vector<2xf32>
    %114 = vector.multi_reduction <add>, %113, %cst_56 [1] : vector<2x2xf32> to vector<2xf32>
    %115 = vector.shape_cast %114 : vector<2xf32> to vector<2x1xf32>
    %116 = tpu.reciprocal %115 : vector<2x1xf32> -> vector<2x1xf32>
    %117 = vector.broadcast %116 : vector<2x1xf32> to vector<2x2xf32>
    %118 = arith.mulf %113, %117 : vector<2x2xf32>
    %c0_57 = arith.constant 0 : index
    %c0_58 = arith.constant 0 : index
    %119 = vector.load %arg7[%c0_57, %c0_58] : memref<2x2xf32, #tpu.memory_space<vmem>>, vector<2x2xf32>
    tpu.vector_store %arg7[%c0_57, %c0_58], %118 {strides = array<i32>} : memref<2x2xf32, #tpu.memory_space<vmem>>, vector<2x2xf32>,
    return
  }
}

</mosaic_0001>

<llo_original>
// kernel: graph_classifier.1
$region0: #{graph_classifier.1}
  #allocation0 [shape = 'u32[]', space=smem, size = 0x4, offset = 0x4, fixed_abs, tag = 'smem constant byte address 0x4 - core index']
  #allocation1 [shape = 'u32[144,128]{1,0:T(1,128)}', space=vmem, size = 0x12000, scoped, tag = 'internal scratch']
  %s0 = inlined_call_operand.vmem [shape: f32[32,16], index: 0, kind: input, shape index: {}]
  %s1 = inlined_call_operand.vmem [shape: f32[64,8], index: 1, kind: input, shape index: {}]
  %s2 = inlined_call_operand.vmem [shape: s32[64,1], index: 2, kind: input, shape index: {}]
  %s3 = inlined_call_operand.vmem [shape: s32[1,64], index: 3, kind: input, shape index: {}]
  %s4 = inlined_call_operand.vmem [shape: s32[2,32], index: 4, kind: input, shape index: {}]
  %s5 = inlined_call_operand.vmem [shape: f32[320,64], index: 5, kind: input, shape index: {}]
  %s6 = inlined_call_operand.vmem [shape: f32[2], index: 6, kind: input, shape index: {}]
  %s7 = inlined_call_operand.hbm [shape: f32[2,2], index: 7, kind: output, shape index: {}]
  %s8 = sld [smem:[#allocation0]]
  $region42: #{graph_classifier.1} parent=0
    _
  %s10 = ssub.s32 1, %s8
  %s11 = scalar_select 0, %s10, %s8
  $region1: #{graph_classifier.1} parent=0
    #allocation2 [shape = 'u8[512]{0}', space=smem, size = 0x200, scoped, tag = 'input window, operand 6, single buffered']
    #allocation3 [shape = 's32[1]{0}', space=sflag, size = 0x4, scoped, tag = 'scoped memory for graph_classifier.1']
    #allocation4 [shape = 's32[1]{0}', space=sflag, size = 0x4, scoped, tag = 'scoped memory for graph_classifier.1']
    #allocation5 [shape = 'u8[1024]{0}', space=vmem, size = 0x400, scoped, tag = 'output window, operand 0, single buffered']
    %12 = vsyncpa [#allocation4], 0
    %13 = vsyncpa [#allocation3], 0
    // Predicated region
    $region2: #{graph_classifier.1} parent=1 // pred_check
      _
    $region3: #{graph_classifier.1} parent=1 // pred_check_branch
      %15 = sbr.rel (0) target = $region5
    $region4: #{graph_classifier.1} parent=1 // pred_region
      _
    $region5: #{graph_classifier.1} parent=1 // pred_fallthru
      _
    // Predicated region
    $region6: #{graph_classifier.1} parent=1 // pred_check
      _
    $region7: #{graph_classifier.1} parent=1 // pred_check_branch
      %17 = sbr.rel (0) target = $region9
    $region8: #{graph_classifier.1} parent=1 // pred_region
      _
    $region9: #{graph_classifier.1} parent=1 // pred_fallthru
      _
    // Predicated region
    $region10: #{graph_classifier.1} parent=1 // pred_check
      _
    $region11: #{graph_classifier.1} parent=1 // pred_check_branch
      %19 = sbr.rel (0) target = $region13
    $region12: #{graph_classifier.1} parent=1 // pred_region
      _
    $region13: #{graph_classifier.1} parent=1 // pred_fallthru
      _
    // Predicated region
    $region14: #{graph_classifier.1} parent=1 // pred_check
      _
    $region15: #{graph_classifier.1} parent=1 // pred_check_branch
      %21 = sbr.rel (0) target = $region17
    $region16: #{graph_classifier.1} parent=1 // pred_region
      _
    $region17: #{graph_classifier.1} parent=1 // pred_fallthru
      _
    // Predicated region
    $region18: #{graph_classifier.1} parent=1 // pred_check
      _
    $region19: #{graph_classifier.1} parent=1 // pred_check_branch
      %23 = sbr.rel (0) target = $region21
    $region20: #{graph_classifier.1} parent=1 // pred_region
      _
    $region21: #{graph_classifier.1} parent=1 // pred_fallthru
      _
    // Predicated region
    $region22: #{graph_classifier.1} parent=1 // pred_check
      _
    $region23: #{graph_classifier.1} parent=1 // pred_check_branch
      %25 = sbr.rel (0) target = $region25
    $region24: #{graph_classifier.1} parent=1 // pred_region
      _
    $region25: #{graph_classifier.1} parent=1 // pred_fallthru
      _
    // Predicated region
    $region26: #{graph_classifier.1} parent=1 // pred_check
      _
    $region27: #{graph_classifier.1} parent=1 // pred_check_branch
      %27 = sbr.rel (0) target = $region29
    $region28: #{graph_classifier.1} parent=1 // pred_region
      %s29 = ssub.s32 16, 16
      %30 = vsyncadd [#allocation4], %s29
      %s32 = sshll.u32 %s6, 4
      %s33 = int_to_ptr.vmem [resolvable:$true] %s32
      %35 = dma.vmem_to_smem %s33, 16, [#allocation2], [#allocation4]
    $region29: #{graph_classifier.1} parent=1 // pred_fallthru
      _
    // Predicated region
    $region30: #{graph_classifier.1} parent=1 // pred_check
      _
    $region31: #{graph_classifier.1} parent=1 // pred_check_branch
      %37 = sbr.rel (0) target = $region33
    $region32: #{graph_classifier.1} parent=1 // pred_region
      %38 = dma.done [#allocation4], 16
    $region33: #{graph_classifier.1} parent=1 // pred_fallthru
      _
    %39 = sfence
    %v40 = vld [vmem:[%s0] sm:$0xff]
    %v41 = vld [vmem:[%s0 + $0x8] sm:$0xff]
    %v42 = vld [vmem:[%s0 + $0x10] sm:$0xff]
    %v43 = vld [vmem:[%s0 + $0x18] sm:$0xff]
    %v44 = vld [vmem:[%s1] sm:$0xff]
    %v45 = vld [vmem:[%s1 + $0x8] sm:$0xff]
    %v46 = vld [vmem:[%s1 + $0x10] sm:$0xff]
    %v47 = vld [vmem:[%s1 + $0x18] sm:$0xff]
    %v48 = vld [vmem:[%s1 + $0x20] sm:$0xff]
    %v49 = vld [vmem:[%s1 + $0x28] sm:$0xff]
    %v50 = vld [vmem:[%s1 + $0x30] sm:$0xff]
    %v51 = vld [vmem:[%s1 + $0x38] sm:$0xff]
    %v52 = vld [vmem:[%s2] sm:$0xff]
    %v53 = vld [vmem:[%s2 + $0x8] sm:$0xff]
    %v54 = vld [vmem:[%s2 + $0x10] sm:$0xff]
    %v55 = vld [vmem:[%s2 + $0x18] sm:$0xff]
    %v56 = vld [vmem:[%s2 + $0x20] sm:$0xff]
    %v57 = vld [vmem:[%s2 + $0x28] sm:$0xff]
    %v58 = vld [vmem:[%s2 + $0x30] sm:$0xff]
    %v59 = vld [vmem:[%s2 + $0x38] sm:$0xff]
    %v60 = vld [vmem:[%s3] sm:$0x1]
    %v61 = vlaneseq
    %v62 = vand.u32 %v61, 127
    %63 = vset.pattern.permute.xlu0 0
    %64 = vperm.xlu0 %63, %v52
    %v65 = vpop.permute.xlu0 %64
    %66 = vset.pattern.permute.xlu0 0
    %67 = vperm.xlu0 %66, %v53
    %v68 = vpop.permute.xlu0 %67
    %69 = vset.pattern.permute.xlu0 0
    %70 = vperm.xlu0 %69, %v54
    %v71 = vpop.permute.xlu0 %70
    %72 = vset.pattern.permute.xlu0 0
    %73 = vperm.xlu0 %72, %v55
    %v74 = vpop.permute.xlu0 %73
    %75 = vset.pattern.permute.xlu0 0
    %76 = vperm.xlu0 %75, %v56
    %v77 = vpop.permute.xlu0 %76
    %78 = vset.pattern.permute.xlu0 0
    %79 = vperm.xlu0 %78, %v57
    %v80 = vpop.permute.xlu0 %79
    %81 = vset.pattern.permute.xlu0 0
    %82 = vperm.xlu0 %81, %v58
    %v83 = vpop.permute.xlu0 %82
    %84 = vset.pattern.permute.xlu0 0
    %85 = vperm.xlu0 %84, %v59
    %v86 = vpop.permute.xlu0 %85
    %vm87 = vcmp.eq.s32.totalorder %v62, %v65
    %vm88 = vcmp.eq.s32.totalorder %v62, %v68
    %vm89 = vcmp.eq.s32.totalorder %v62, %v71
    %vm90 = vcmp.eq.s32.totalorder %v62, %v74
    %vm91 = vcmp.eq.s32.totalorder %v62, %v77
    %vm92 = vcmp.eq.s32.totalorder %v62, %v80
    %vm93 = vcmp.eq.s32.totalorder %v62, %v83
    %vm94 = vcmp.eq.s32.totalorder %v62, %v86
    %v95 = vsel %vm87, 1, 0
    %v96 = vsel %vm88, 1, 0
    %v97 = vsel %vm89, 1, 0
    %v98 = vsel %vm90, 1, 0
    %v99 = vsel %vm91, 1, 0
    %v100 = vsel %vm92, 1, 0
    %v101 = vsel %vm93, 1, 0
    %v102 = vsel %vm94, 1, 0
    %v103 = vcvt.s32.f32 %v95
    %v104 = vcvt.s32.f32 %v96
    %v105 = vcvt.s32.f32 %v97
    %v106 = vcvt.s32.f32 %v98
    %v107 = vcvt.s32.f32 %v99
    %v108 = vcvt.s32.f32 %v100
    %v109 = vcvt.s32.f32 %v101
    %v110 = vcvt.s32.f32 %v102
    %v111 = vlaneseq
    %v112 = vshrl.u32 %v111, 7
    %v113 = vadd.s32 %v112, 8
    %v114 = vadd.s32 %v112, 16
    %v115 = vadd.s32 %v112, 24
    %v116 = vlaneseq
    %v117 = vshrl.u32 %v116, 7
    %v118 = vsub.s32 0, %v117
    %v119 = vrot.slane %v60, %v118
    %vm120 = vcmp.eq.s32.totalorder %v112, %v119
    %vm121 = vcmp.eq.s32.totalorder %v113, %v119
    %vm122 = vcmp.eq.s32.totalorder %v114, %v119
    %vm123 = vcmp.eq.s32.totalorder %v115, %v119
    %v124 = vsel %vm120, 1, 0
    %v125 = vsel %vm121, 1, 0
    %v126 = vsel %vm122, 1, 0
    %v127 = vsel %vm123, 1, 0
    %v128 = vcvt.s32.f32 %v124
    %v129 = vcvt.s32.f32 %v125
    %v130 = vcvt.s32.f32 %v126
    %v131 = vcvt.s32.f32 %v127
    %v132 = vld [vmem:[%s4] sm:$0x1]
    %v133 = vlaneseq
    %v134 = vshrl.u32 %v133, 7
    %v135 = vsub.s32 0, %v134
    %v136 = vrot.slane %v132, %v135
    %vm137 = vcmp.eq.s32.totalorder %v112, %v136
    %v138 = vsel %vm137, 1, 0
    %v139 = vcvt.s32.f32 %v138
    %v140 = vld [vmem:[%s4 + $0x1] sm:$0x1]
    %v141 = vlaneseq
    %v142 = vshrl.u32 %v141, 7
    %v143 = vsub.s32 0, %v142
    %v144 = vrot.slane %v140, %v143
    %vm145 = vcmp.eq.s32.totalorder %v112, %v144
    %v146 = vsel %vm145, 1, 0
    %v147 = vcvt.s32.f32 %v146
    %vm148 = vcmask 254976
    %v149 = vsel %vm148, %v139, 0.0
    %150 = vadd.xlane.f32.xlu0 %v149
    %v151 = vpop.xlane.xlu0 %150
    %v152 = vmax.f32 %v151, 1.0
    %v153 = vrcp.pop %v152
    %v154 = vmul.f32 %v139, %v153
    %v155 = vsel %vm148, %v147, 0.0
    %156 = vadd.xlane.f32.xlu0 %v155
    %v157 = vpop.xlane.xlu0 %156
    %v158 = vmax.f32 %v157, 1.0
    %v159 = vrcp.pop %v158
    %v160 = vmul.f32 %v147, %v159
    %s161 = sld [smem:[#allocation2]]
    %s162 = sld [smem:[#allocation2 + $0x1]]
    %v163 = vld [vmem:[%s5] sm:$0xff]
    %v164 = vld [vmem:[%s5 + $0x8] sm:$0x1]
    %v165 = vld [vmem:[%s5 + $0x10] sm:$0xff]
    %v166 = vld [vmem:[%s5 + $0x18] sm:$0xff]
    %v167 = vld [vmem:[%s5 + $0x20] sm:$0x1]
    %v168 = vld [vmem:[%s5 + $0x28] sm:$0xff]
    %v169 = vld [vmem:[%s5 + $0x30] sm:$0xff]
    %v170 = vld [vmem:[%s5 + $0x38] sm:$0xff]
    %v171 = vld [vmem:[%s5 + $0x40] sm:$0xff]
    %v172 = vld [vmem:[%s5 + $0x48] sm:$0x1]
    %v173 = vlaneseq
    %v174 = vshrl.u32 %v173, 7
    %v175 = vsub.s32 0, %v174
    %v176 = vrot.slane %v164, %v175
    %vm177 = vcmask 64512
    %v179 = vsel %vm177, %v44, 0
    %v182 = vsel %vm177, %v45, 0
    %v185 = vsel %vm177, %v46, 0
    %v188 = vsel %vm177, %v47, 0
    %v191 = vsel %vm177, %v48, 0
    %v194 = vsel %vm177, %v49, 0
    %v197 = vsel %vm177, %v50, 0
    %v200 = vsel %vm177, %v51, 0
    %202 = vmatprep.subr.mxu0 0.0
    %203 = vmatpush1.msra.mxu0 %v163
    %204 = vmatprep.subr.mxu0 0.0
    %205 = vmatpush1.msra.mxu0 0.0
    %206 = vmatprep.subr.mxu0 0.0
    %207 = vmatpush1.msra.mxu0 0.0
    %208 = vmatprep.subr.mxu0 0.0
    %209 = vmatpush1.msra.mxu0 0.0
    %210 = vmatprep.subr.mxu0 0.0
    %211 = vmatpush1.msra.mxu0 0.0
    %212 = vmatprep.subr.mxu0 0.0
    %213 = vmatpush1.msra.mxu0 0.0
    %214 = vmatprep.subr.mxu0 0.0
    %215 = vmatpush1.msra.mxu0 0.0
    %216 = vmatprep.subr.mxu0 0.0
    %217 = vmatpush1.msra.mxu0 0.0
    %218 = vmatprep.subr.mxu0 0.0
    %219 = vmatpush1.msra.mxu0 0.0
    %220 = vmatprep.subr.mxu0 0.0
    %221 = vmatpush1.msra.mxu0 0.0
    %222 = vmatprep.subr.mxu0 0.0
    %223 = vmatpush1.msra.mxu0 0.0
    %224 = vmatprep.subr.mxu0 0.0
    %225 = vmatpush1.msra.mxu0 0.0
    %226 = vmatprep.subr.mxu0 0.0
    %227 = vmatpush1.msra.mxu0 0.0
    %228 = vmatprep.subr.mxu0 0.0
    %229 = vmatpush1.msra.mxu0 0.0
    %230 = vmatprep.subr.mxu0 0.0
    %231 = vmatpush1.msra.mxu0 0.0
    %232 = vmatprep.subr.mxu0 0.0
    %233 = vmatpush1.msra.mxu0 0.0
    %234 = vmatprep.subr.mxu0 0.0
    %235 = vmatpush1.msra.mxu0 0.0
    %236 = vmatprep.subr.mxu0 0.0
    %237 = vmatpush1.msra.mxu0 0.0
    %238 = vmatprep.subr.mxu0 0.0
    %239 = vmatpush1.msra.mxu0 0.0
    %240 = vmatprep.subr.mxu0 0.0
    %241 = vmatpush1.msra.mxu0 0.0
    %242 = vmatprep.subr.mxu0 0.0
    %243 = vmatpush1.msra.mxu0 0.0
    %244 = vmatprep.subr.mxu0 0.0
    %245 = vmatpush1.msra.mxu0 0.0
    %246 = vmatprep.subr.mxu0 0.0
    %247 = vmatpush1.msra.mxu0 0.0
    %248 = vmatprep.subr.mxu0 0.0
    %249 = vmatpush1.msra.mxu0 0.0
    %250 = vmatprep.subr.mxu0 0.0
    %251 = vmatpush1.msra.mxu0 0.0
    %252 = vmatprep.subr.mxu0 0.0
    %253 = vmatpush1.msra.mxu0 0.0
    %254 = vmatprep.subr.mxu0 0.0
    %255 = vmatpush1.msra.mxu0 0.0
    %256 = vmatprep.subr.mxu0 0.0
    %257 = vmatpush1.msra.mxu0 0.0
    %258 = vmatprep.subr.mxu0 0.0
    %259 = vmatpush1.msra.mxu0 0.0
    %260 = vmatprep.subr.mxu0 0.0
    %261 = vmatpush1.msra.mxu0 0.0
    %262 = vmatprep.subr.mxu0 0.0
    %263 = vmatpush1.msra.mxu0 0.0
    %264 = vmatprep.subr.mxu0 0.0
    %265 = vmatpush1.msra.mxu0 0.0
    %266 = vmatprep.mubr.f32.mxu0 0.0
    %267 = vmatmul.mubr.f32.gmra.mrb[0].mxu0 %v179
    %v268 = vpop.f32.mrb[0].mxu0
    %v269 = vadd.f32 %v176, %v268
    %v270 = vpop.f32.mrb[0].mxu0
    %271 = vmatprep.mubr.f32.mxu0 0.0
    %272 = vmatmul.mubr.f32.gmra.mrb[0].mxu0 %v182
    %v273 = vpop.f32.mrb[0].mxu0
    %v274 = vadd.f32 %v176, %v273
    %v275 = vpop.f32.mrb[0].mxu0
    %276 = vmatprep.mubr.f32.mxu0 0.0
    %277 = vmatmul.mubr.f32.gmra.mrb[0].mxu0 %v185
    %v278 = vpop.f32.mrb[0].mxu0
    %v279 = vadd.f32 %v176, %v278
    %v280 = vpop.f32.mrb[0].mxu0
    %281 = vmatprep.mubr.f32.mxu0 0.0
    %282 = vmatmul.mubr.f32.gmra.mrb[0].mxu0 %v188
    %v283 = vpop.f32.mrb[0].mxu0
    %v284 = vadd.f32 %v176, %v283
    %v285 = vpop.f32.mrb[0].mxu0
    %286 = vmatprep.mubr.f32.mxu0 0.0
    %287 = vmatmul.mubr.f32.gmra.mrb[0].mxu0 %v191
    %v288 = vpop.f32.mrb[0].mxu0
    %v289 = vadd.f32 %v176, %v288
    %v290 = vpop.f32.mrb[0].mxu0
    %291 = vmatprep.mubr.f32.mxu0 0.0
    %292 = vmatmul.mubr.f32.gmra.mrb[0].mxu0 %v194
    %v293 = vpop.f32.mrb[0].mxu0
    %v294 = vadd.f32 %v176, %v293
    %v295 = vpop.f32.mrb[0].mxu0
    %296 = vmatprep.mubr.f32.mxu0 0.0
    %297 = vmatmul.mubr.f32.gmra.mrb[0].mxu0 %v197
    %v298 = vpop.f32.mrb[0].mxu0
    %v299 = vadd.f32 %v176, %v298
    %v300 = vpop.f32.mrb[0].mxu0
    %301 = vmatprep.mubr.f32.mxu0 0.0
    %302 = vmatmul.mubr.f32.gmra.mrb[0].mxu0 %v200
    %v303 = vpop.f32.mrb[0].mxu0
    %v304 = vadd.f32 %v176, %v303
    %v305 = vpop.f32.mrb[0].mxu0
    %306 = vdwg.mxu0
    %vm307 = vcmask 261120
    %v309 = vsel %vm307, %v103, 0
    %v312 = vsel %vm307, %v104, 0
    %v315 = vsel %vm307, %v105, 0
    %v318 = vsel %vm307, %v106, 0
    %v321 = vsel %vm307, %v107, 0
    %v324 = vsel %vm307, %v108, 0
    %v327 = vsel %vm307, %v109, 0
    %v330 = vsel %vm307, %v110, 0
    %332 = vmatprep.subr.mxu0 0.0
    %333 = vmatpush1.msra.mxu0 %v40
    %334 = vmatprep.subr.mxu0 0.0
    %335 = vmatpush1.msra.mxu0 %v41
    %336 = vmatprep.subr.mxu0 0.0
    %337 = vmatpush1.msra.mxu0 %v42
    %338 = vmatprep.subr.mxu0 0.0
    %339 = vmatpush1.msra.mxu0 %v43
    %340 = vmatprep.subr.mxu0 0.0
    %341 = vmatpush1.msra.mxu0 0.0
    %342 = vmatprep.subr.mxu0 0.0
    %343 = vmatpush1.msra.mxu0 0.0
    %344 = vmatprep.subr.mxu0 0.0
    %345 = vmatpush1.msra.mxu0 0.0
    %346 = vmatprep.subr.mxu0 0.0
    %347 = vmatpush1.msra.mxu0 0.0
    %348 = vmatprep.subr.mxu0 0.0
    %349 = vmatpush1.msra.mxu0 0.0
    %350 = vmatprep.subr.mxu0 0.0
    %351 = vmatpush1.msra.mxu0 0.0
    %352 = vmatprep.subr.mxu0 0.0
    %353 = vmatpush1.msra.mxu0 0.0
    %354 = vmatprep.subr.mxu0 0.0
    %355 = vmatpush1.msra.mxu0 0.0
    %356 = vmatprep.subr.mxu0 0.0
    %357 = vmatpush1.msra.mxu0 0.0
    %358 = vmatprep.subr.mxu0 0.0
    %359 = vmatpush1.msra.mxu0 0.0
    %360 = vmatprep.subr.mxu0 0.0
    %361 = vmatpush1.msra.mxu0 0.0
    %362 = vmatprep.subr.mxu0 0.0
    %363 = vmatpush1.msra.mxu0 0.0
    %364 = vmatprep.subr.mxu0 0.0
    %365 = vmatpush1.msra.mxu0 0.0
    %366 = vmatprep.subr.mxu0 0.0
    %367 = vmatpush1.msra.mxu0 0.0
    %368 = vmatprep.subr.mxu0 0.0
    %369 = vmatpush1.msra.mxu0 0.0
    %370 = vmatprep.subr.mxu0 0.0
    %371 = vmatpush1.msra.mxu0 0.0
    %372 = vmatprep.subr.mxu0 0.0
    %373 = vmatpush1.msra.mxu0 0.0
    %374 = vmatprep.subr.mxu0 0.0
    %375 = vmatpush1.msra.mxu0 0.0
    %376 = vmatprep.subr.mxu0 0.0
    %377 = vmatpush1.msra.mxu0 0.0
    %378 = vmatprep.subr.mxu0 0.0
    %379 = vmatpush1.msra.mxu0 0.0
    %380 = vmatprep.subr.mxu0 0.0
    %381 = vmatpush1.msra.mxu0 0.0
    %382 = vmatprep.subr.mxu0 0.0
    %383 = vmatpush1.msra.mxu0 0.0
    %384 = vmatprep.subr.mxu0 0.0
    %385 = vmatpush1.msra.mxu0 0.0
    %386 = vmatprep.subr.mxu0 0.0
    %387 = vmatpush1.msra.mxu0 0.0
    %388 = vmatprep.subr.mxu0 0.0
    %389 = vmatpush1.msra.mxu0 0.0
    %390 = vmatprep.subr.mxu0 0.0
    %391 = vmatpush1.msra.mxu0 0.0
    %392 = vmatprep.subr.mxu0 0.0
    %393 = vmatpush1.msra.mxu0 0.0
    %394 = vmatprep.subr.mxu0 0.0
    %395 = vmatpush1.msra.mxu0 0.0
    %396 = vmatprep.mubr.f32.mxu0 0.0
    %397 = vmatmul.mubr.f32.gmra.mrb[0].mxu0 %v309
    %v398 = vpop.f32.mrb[0].mxu0
    %v399 = vadd.f32 %v269, %v398
    %v400 = vpop.f32.mrb[0].mxu0
    %401 = vmatprep.mubr.f32.mxu0 0.0
    %402 = vmatmul.mubr.f32.gmra.mrb[0].mxu0 %v312
    %v403 = vpop.f32.mrb[0].mxu0
    %v404 = vadd.f32 %v274, %v403
    %v405 = vpop.f32.mrb[0].mxu0
    %406 = vmatprep.mubr.f32.mxu0 0.0
    %407 = vmatmul.mubr.f32.gmra.mrb[0].mxu0 %v315
    %v408 = vpop.f32.mrb[0].mxu0
    %v409 = vadd.f32 %v279, %v408
    %v410 = vpop.f32.mrb[0].mxu0
    %411 = vmatprep.mubr.f32.mxu0 0.0
    %412 = vmatmul.mubr.f32.gmra.mrb[0].mxu0 %v318
    %v413 = vpop.f32.mrb[0].mxu0
    %v414 = vadd.f32 %v284, %v413
    %v415 = vpop.f32.mrb[0].mxu0
    %416 = vmatprep.mubr.f32.mxu0 0.0
    %417 = vmatmul.mubr.f32.gmra.mrb[0].mxu0 %v321
    %v418 = vpop.f32.mrb[0].mxu0
    %v419 = vadd.f32 %v289, %v418
    %v420 = vpop.f32.mrb[0].mxu0
    %421 = vmatprep.mubr.f32.mxu0 0.0
    %422 = vmatmul.mubr.f32.gmra.mrb[0].mxu0 %v324
    %v423 = vpop.f32.mrb[0].mxu0
    %v424 = vadd.f32 %v294, %v423
    %v425 = vpop.f32.mrb[0].mxu0
    %426 = vmatprep.mubr.f32.mxu0 0.0
    %427 = vmatmul.mubr.f32.gmra.mrb[0].mxu0 %v327
    %v428 = vpop.f32.mrb[0].mxu0
    %v429 = vadd.f32 %v299, %v428
    %v430 = vpop.f32.mrb[0].mxu0
    %431 = vmatprep.mubr.f32.mxu0 0.0
    %432 = vmatmul.mubr.f32.gmra.mrb[0].mxu0 %v330
    %v433 = vpop.f32.mrb[0].mxu0
    %v434 = vadd.f32 %v304, %v433
    %v435 = vpop.f32.mrb[0].mxu0
    %436 = vdwg.mxu0
    %v437 = vmax.f32 %v399, 0.0
    %v438 = vmax.f32 %v404, 0.0
    %v439 = vmax.f32 %v409, 0.0
    %v440 = vmax.f32 %v414, 0.0
    %v441 = vmax.f32 %v419, 0.0
    %v442 = vmax.f32 %v424, 0.0
    %v443 = vmax.f32 %v429, 0.0
    %v444 = vmax.f32 %v434, 0.0
    %vm445 = vcmask 523264
    %v447 = vsel %vm445, %v128, 0
    %v450 = vsel %vm445, %v129, 0
    %v453 = vsel %vm445, %v130, 0
    %v456 = vsel %vm445, %v131, 0
    %458 = vmatprep.subr.mxu0 0.0
    %459 = vmatpush1.msra.mxu0 %v437
    %460 = vmatprep.subr.mxu0 0.0
    %461 = vmatpush1.msra.mxu0 %v438
    %462 = vmatprep.subr.mxu0 0.0
    %463 = vmatpush1.msra.mxu0 %v439
    %464 = vmatprep.subr.mxu0 0.0
    %465 = vmatpush1.msra.mxu0 %v440
    %466 = vmatprep.subr.mxu0 0.0
    %467 = vmatpush1.msra.mxu0 %v441
    %468 = vmatprep.subr.mxu0 0.0
    %469 = vmatpush1.msra.mxu0 %v442
    %470 = vmatprep.subr.mxu0 0.0
    %471 = vmatpush1.msra.mxu0 %v443
    %472 = vmatprep.subr.mxu0 0.0
    %473 = vmatpush1.msra.mxu0 %v444
    %474 = vmatprep.subr.mxu0 0.0
    %475 = vmatpush1.msra.mxu0 0.0
    %476 = vmatprep.subr.mxu0 0.0
    %477 = vmatpush1.msra.mxu0 0.0
    %478 = vmatprep.subr.mxu0 0.0
    %479 = vmatpush1.msra.mxu0 0.0
    %480 = vmatprep.subr.mxu0 0.0
    %481 = vmatpush1.msra.mxu0 0.0
    %482 = vmatprep.subr.mxu0 0.0
    %483 = vmatpush1.msra.mxu0 0.0
    %484 = vmatprep.subr.mxu0 0.0
    %485 = vmatpush1.msra.mxu0 0.0
    %486 = vmatprep.subr.mxu0 0.0
    %487 = vmatpush1.msra.mxu0 0.0
    %488 = vmatprep.subr.mxu0 0.0
    %489 = vmatpush1.msra.mxu0 0.0
    %490 = vmatprep.subr.mxu0 0.0
    %491 = vmatpush1.msra.mxu0 0.0
    %492 = vmatprep.subr.mxu0 0.0
    %493 = vmatpush1.msra.mxu0 0.0
    %494 = vmatprep.subr.mxu0 0.0
    %495 = vmatpush1.msra.mxu0 0.0
    %496 = vmatprep.subr.mxu0 0.0
    %497 = vmatpush1.msra.mxu0 0.0
    %498 = vmatprep.subr.mxu0 0.0
    %499 = vmatpush1.msra.mxu0 0.0
    %500 = vmatprep.subr.mxu0 0.0
    %501 = vmatpush1.msra.mxu0 0.0
    %502 = vmatprep.subr.mxu0 0.0
    %503 = vmatpush1.msra.mxu0 0.0
    %504 = vmatprep.subr.mxu0 0.0
    %505 = vmatpush1.msra.mxu0 0.0
    %506 = vmatprep.subr.mxu0 0.0
    %507 = vmatpush1.msra.mxu0 0.0
    %508 = vmatprep.subr.mxu0 0.0
    %509 = vmatpush1.msra.mxu0 0.0
    %510 = vmatprep.subr.mxu0 0.0
    %511 = vmatpush1.msra.mxu0 0.0
    %512 = vmatprep.subr.mxu0 0.0
    %513 = vmatpush1.msra.mxu0 0.0
    %514 = vmatprep.subr.mxu0 0.0
    %515 = vmatpush1.msra.mxu0 0.0
    %516 = vmatprep.subr.mxu0 0.0
    %517 = vmatpush1.msra.mxu0 0.0
    %518 = vmatprep.subr.mxu0 0.0
    %519 = vmatpush1.msra.mxu0 0.0
    %520 = vmatprep.subr.mxu0 0.0
    %521 = vmatpush1.msra.mxu0 0.0
    %522 = vmatprep.mubr.f32.mxu0 0.0
    %523 = vmatmul.mubr.f32.gmra.mrb[0].mxu0 %v447
    %v524 = vpop.f32.mrb[0].mxu0
    %v525 = vadd.f32 0.0, %v524
    %v526 = vpop.f32.mrb[0].mxu0
    %527 = vmatprep.mubr.f32.mxu0 0.0
    %528 = vmatmul.mubr.f32.gmra.mrb[0].mxu0 %v450
    %v529 = vpop.f32.mrb[0].mxu0
    %v530 = vadd.f32 0.0, %v529
    %v531 = vpop.f32.mrb[0].mxu0
    %532 = vmatprep.mubr.f32.mxu0 0.0
    %533 = vmatmul.mubr.f32.gmra.mrb[0].mxu0 %v453
    %v534 = vpop.f32.mrb[0].mxu0
    %v535 = vadd.f32 0.0, %v534
    %v536 = vpop.f32.mrb[0].mxu0
    %537 = vmatprep.mubr.f32.mxu0 0.0
    %538 = vmatmul.mubr.f32.gmra.mrb[0].mxu0 %v456
    %v539 = vpop.f32.mrb[0].mxu0
    %v540 = vadd.f32 0.0, %v539
    %v541 = vpop.f32.mrb[0].mxu0
    %542 = vdwg.mxu0
    %s543 = sadd.f32 %s161, 1.0
    %v544 = vstv %s543
    %v545 = vmul.f32 %v544, %v40
    %v546 = vmul.f32 %v544, %v41
    %v547 = vmul.f32 %v544, %v42
    %v548 = vmul.f32 %v544, %v43
    %v549 = vadd.f32 %v545, %v525
    %v550 = vadd.f32 %v546, %v530
    %v551 = vadd.f32 %v547, %v535
    %v552 = vadd.f32 %v548, %v540
    %v553 = vlaneseq
    %v554 = vshrl.u32 %v553, 7
    %v555 = vsub.s32 0, %v554
    %v556 = vrot.slane %v167, %v555
    %vm557 = vcmask 130048
    %v559 = vsel %vm557, %v549, 0
    %v562 = vsel %vm557, %v550, 0
    %v565 = vsel %vm557, %v551, 0
    %v568 = vsel %vm557, %v552, 0
    %570 = vmatprep.subr.mxu0 0.0
    %571 = vmatpush1.msra.mxu0 %v165
    %572 = vmatprep.subr.mxu0 0.0
    %573 = vmatpush1.msra.mxu0 %v166
    %574 = vmatprep.subr.mxu0 0.0
    %575 = vmatpush1.msra.mxu0 0.0
    %576 = vmatprep.subr.mxu0 0.0
    %577 = vmatpush1.msra.mxu0 0.0
    %578 = vmatprep.subr.mxu0 0.0
    %579 = vmatpush1.msra.mxu0 0.0
    %580 = vmatprep.subr.mxu0 0.0
    %581 = vmatpush1.msra.mxu0 0.0
    %582 = vmatprep.subr.mxu0 0.0
    %583 = vmatpush1.msra.mxu0 0.0
    %584 = vmatprep.subr.mxu0 0.0
    %585 = vmatpush1.msra.mxu0 0.0
    %586 = vmatprep.subr.mxu0 0.0
    %587 = vmatpush1.msra.mxu0 0.0
    %588 = vmatprep.subr.mxu0 0.0
    %589 = vmatpush1.msra.mxu0 0.0
    %590 = vmatprep.subr.mxu0 0.0
    %591 = vmatpush1.msra.mxu0 0.0
    %592 = vmatprep.subr.mxu0 0.0
    %593 = vmatpush1.msra.mxu0 0.0
    %594 = vmatprep.subr.mxu0 0.0
    %595 = vmatpush1.msra.mxu0 0.0
    %596 = vmatprep.subr.mxu0 0.0
    %597 = vmatpush1.msra.mxu0 0.0
    %598 = vmatprep.subr.mxu0 0.0
    %599 = vmatpush1.msra.mxu0 0.0
    %600 = vmatprep.subr.mxu0 0.0
    %601 = vmatpush1.msra.mxu0 0.0
    %602 = vmatprep.subr.mxu0 0.0
    %603 = vmatpush1.msra.mxu0 0.0
    %604 = vmatprep.subr.mxu0 0.0
    %605 = vmatpush1.msra.mxu0 0.0
    %606 = vmatprep.subr.mxu0 0.0
    %607 = vmatpush1.msra.mxu0 0.0
    %608 = vmatprep.subr.mxu0 0.0
    %609 = vmatpush1.msra.mxu0 0.0
    %610 = vmatprep.subr.mxu0 0.0
    %611 = vmatpush1.msra.mxu0 0.0
    %612 = vmatprep.subr.mxu0 0.0
    %613 = vmatpush1.msra.mxu0 0.0
    %614 = vmatprep.subr.mxu0 0.0
    %615 = vmatpush1.msra.mxu0 0.0
    %616 = vmatprep.subr.mxu0 0.0
    %617 = vmatpush1.msra.mxu0 0.0
    %618 = vmatprep.subr.mxu0 0.0
    %619 = vmatpush1.msra.mxu0 0.0
    %620 = vmatprep.subr.mxu0 0.0
    %621 = vmatpush1.msra.mxu0 0.0
    %622 = vmatprep.subr.mxu0 0.0
    %623 = vmatpush1.msra.mxu0 0.0
    %624 = vmatprep.subr.mxu0 0.0
    %625 = vmatpush1.msra.mxu0 0.0
    %626 = vmatprep.subr.mxu0 0.0
    %627 = vmatpush1.msra.mxu0 0.0
    %628 = vmatprep.subr.mxu0 0.0
    %629 = vmatpush1.msra.mxu0 0.0
    %630 = vmatprep.subr.mxu0 0.0
    %631 = vmatpush1.msra.mxu0 0.0
    %632 = vmatprep.subr.mxu0 0.0
    %633 = vmatpush1.msra.mxu0 0.0
    %634 = vmatprep.mubr.f32.mxu0 0.0
    %635 = vmatmul.mubr.f32.gmra.mrb[0].mxu0 %v559
    %v636 = vpop.f32.mrb[0].mxu0
    %v637 = vadd.f32 %v556, %v636
    %v638 = vpop.f32.mrb[0].mxu0
    %639 = vmatprep.mubr.f32.mxu0 0.0
    %640 = vmatmul.mubr.f32.gmra.mrb[0].mxu0 %v562
    %v641 = vpop.f32.mrb[0].mxu0
    %v642 = vadd.f32 %v556, %v641
    %v643 = vpop.f32.mrb[0].mxu0
    %644 = vmatprep.mubr.f32.mxu0 0.0
    %645 = vmatmul.mubr.f32.gmra.mrb[0].mxu0 %v565
    %v646 = vpop.f32.mrb[0].mxu0
    %v647 = vadd.f32 %v556, %v646
    %v648 = vpop.f32.mrb[0].mxu0
    %649 = vmatprep.mubr.f32.mxu0 0.0
    %650 = vmatmul.mubr.f32.gmra.mrb[0].mxu0 %v568
    %v651 = vpop.f32.mrb[0].mxu0
    %v652 = vadd.f32 %v556, %v651
    %v653 = vpop.f32.mrb[0].mxu0
    %654 = vdwg.mxu0
    %v655 = vmax.f32 %v637, 0.0
    %v656 = vmax.f32 %v642, 0.0
    %v657 = vmax.f32 %v647, 0.0
    %v658 = vmax.f32 %v652, 0.0
    %v659 = vlaneseq
    %v660 = vshrl.u32 %v659, 7
    %v661 = vsub.s32 0, %v660
    %v662 = vrot.slane %v172, %v661
    %v664 = vsel %vm307, %v655, 0
    %v667 = vsel %vm307, %v656, 0
    %v670 = vsel %vm307, %v657, 0
    %v673 = vsel %vm307, %v658, 0
    %675 = vmatprep.subr.mxu0 0.0
    %676 = vmatpush1.msra.mxu0 %v168
    %677 = vmatprep.subr.mxu0 0.0
    %678 = vmatpush1.msra.mxu0 %v169
    %679 = vmatprep.subr.mxu0 0.0
    %680 = vmatpush1.msra.mxu0 %v170
    %681 = vmatprep.subr.mxu0 0.0
    %682 = vmatpush1.msra.mxu0 %v171
    %683 = vmatprep.subr.mxu0 0.0
    %684 = vmatpush1.msra.mxu0 0.0
    %685 = vmatprep.subr.mxu0 0.0
    %686 = vmatpush1.msra.mxu0 0.0
    %687 = vmatprep.subr.mxu0 0.0
    %688 = vmatpush1.msra.mxu0 0.0
    %689 = vmatprep.subr.mxu0 0.0
    %690 = vmatpush1.msra.mxu0 0.0
    %691 = vmatprep.subr.mxu0 0.0
    %692 = vmatpush1.msra.mxu0 0.0
    %693 = vmatprep.subr.mxu0 0.0
    %694 = vmatpush1.msra.mxu0 0.0
    %695 = vmatprep.subr.mxu0 0.0
    %696 = vmatpush1.msra.mxu0 0.0
    %697 = vmatprep.subr.mxu0 0.0
    %698 = vmatpush1.msra.mxu0 0.0
    %699 = vmatprep.subr.mxu0 0.0
    %700 = vmatpush1.msra.mxu0 0.0
    %701 = vmatprep.subr.mxu0 0.0
    %702 = vmatpush1.msra.mxu0 0.0
    %703 = vmatprep.subr.mxu0 0.0
    %704 = vmatpush1.msra.mxu0 0.0
    %705 = vmatprep.subr.mxu0 0.0
    %706 = vmatpush1.msra.mxu0 0.0
    %707 = vmatprep.subr.mxu0 0.0
    %708 = vmatpush1.msra.mxu0 0.0
    %709 = vmatprep.subr.mxu0 0.0
    %710 = vmatpush1.msra.mxu0 0.0
    %711 = vmatprep.subr.mxu0 0.0
    %712 = vmatpush1.msra.mxu0 0.0
    %713 = vmatprep.subr.mxu0 0.0
    %714 = vmatpush1.msra.mxu0 0.0
    %715 = vmatprep.subr.mxu0 0.0
    %716 = vmatpush1.msra.mxu0 0.0
    %717 = vmatprep.subr.mxu0 0.0
    %718 = vmatpush1.msra.mxu0 0.0
    %719 = vmatprep.subr.mxu0 0.0
    %720 = vmatpush1.msra.mxu0 0.0
    %721 = vmatprep.subr.mxu0 0.0
    %722 = vmatpush1.msra.mxu0 0.0
    %723 = vmatprep.subr.mxu0 0.0
    %724 = vmatpush1.msra.mxu0 0.0
    %725 = vmatprep.subr.mxu0 0.0
    %726 = vmatpush1.msra.mxu0 0.0
    %727 = vmatprep.subr.mxu0 0.0
    %728 = vmatpush1.msra.mxu0 0.0
    %729 = vmatprep.subr.mxu0 0.0
    %730 = vmatpush1.msra.mxu0 0.0
    %731 = vmatprep.subr.mxu0 0.0
    %732 = vmatpush1.msra.mxu0 0.0
    %733 = vmatprep.subr.mxu0 0.0
    %734 = vmatpush1.msra.mxu0 0.0
    %735 = vmatprep.subr.mxu0 0.0
    %736 = vmatpush1.msra.mxu0 0.0
    %737 = vmatprep.subr.mxu0 0.0
    %738 = vmatpush1.msra.mxu0 0.0
    %739 = vmatprep.mubr.f32.mxu0 0.0
    %740 = vmatmul.mubr.f32.gmra.mrb[0].mxu0 %v664
    %v741 = vpop.f32.mrb[0].mxu0
    %v742 = vadd.f32 %v662, %v741
    %v743 = vpop.f32.mrb[0].mxu0
    %744 = vmatprep.mubr.f32.mxu0 0.0
    %745 = vmatmul.mubr.f32.gmra.mrb[0].mxu0 %v667
    %v746 = vpop.f32.mrb[0].mxu0
    %v747 = vadd.f32 %v662, %v746
    %v748 = vpop.f32.mrb[0].mxu0
    %749 = vmatprep.mubr.f32.mxu0 0.0
    %750 = vmatmul.mubr.f32.gmra.mrb[0].mxu0 %v670
    %v751 = vpop.f32.mrb[0].mxu0
    %v752 = vadd.f32 %v662, %v751
    %v753 = vpop.f32.mrb[0].mxu0
    %754 = vmatprep.mubr.f32.mxu0 0.0
    %755 = vmatmul.mubr.f32.gmra.mrb[0].mxu0 %v673
    %v756 = vpop.f32.mrb[0].mxu0
    %v757 = vadd.f32 %v662, %v756
    %v758 = vpop.f32.mrb[0].mxu0
    %759 = vdwg.mxu0
    %v760 = vld [vmem:[%s5 + $0x50] sm:$0xff]
    %v761 = vld [vmem:[%s5 + $0x58] sm:$0x1]
    %v762 = vld [vmem:[%s5 + $0x60] sm:$0xff]
    %v763 = vld [vmem:[%s5 + $0x68] sm:$0xff]
    %v764 = vld [vmem:[%s5 + $0x70] sm:$0xff]
    %v765 = vld [vmem:[%s5 + $0x78] sm:$0xff]
    %v766 = vld [vmem:[%s5 + $0x80] sm:$0x1]
    %v767 = vld [vmem:[%s5 + $0x88] sm:$0xff]
    %v768 = vld [vmem:[%s5 + $0x90] sm:$0xff]
    %v769 = vld [vmem:[%s5 + $0x98] sm:$0xff]
    %v770 = vld [vmem:[%s5 + $0xa0] sm:$0xff]
    %v771 = vld [vmem:[%s5 + $0xa8] sm:$0x1]
    %v772 = vlaneseq
    %v773 = vshrl.u32 %v772, 7
    %v774 = vsub.s32 0, %v773
    %v775 = vrot.slane %v761, %v774
    %776 = vmatprep.subr.mxu0 0.0
    %777 = vmatpush1.msra.mxu0 %v760
    %778 = vmatprep.subr.mxu0 0.0
    %779 = vmatpush1.msra.mxu0 0.0
    %780 = vmatprep.subr.mxu0 0.0
    %781 = vmatpush1.msra.mxu0 0.0
    %782 = vmatprep.subr.mxu0 0.0
    %783 = vmatpush1.msra.mxu0 0.0
    %784 = vmatprep.subr.mxu0 0.0
    %785 = vmatpush1.msra.mxu0 0.0
    %786 = vmatprep.subr.mxu0 0.0
    %787 = vmatpush1.msra.mxu0 0.0
    %788 = vmatprep.subr.mxu0 0.0
    %789 = vmatpush1.msra.mxu0 0.0
    %790 = vmatprep.subr.mxu0 0.0
    %791 = vmatpush1.msra.mxu0 0.0
    %792 = vmatprep.subr.mxu0 0.0
    %793 = vmatpush1.msra.mxu0 0.0
    %794 = vmatprep.subr.mxu0 0.0
    %795 = vmatpush1.msra.mxu0 0.0
    %796 = vmatprep.subr.mxu0 0.0
    %797 = vmatpush1.msra.mxu0 0.0
    %798 = vmatprep.subr.mxu0 0.0
    %799 = vmatpush1.msra.mxu0 0.0
    %800 = vmatprep.subr.mxu0 0.0
    %801 = vmatpush1.msra.mxu0 0.0
    %802 = vmatprep.subr.mxu0 0.0
    %803 = vmatpush1.msra.mxu0 0.0
    %804 = vmatprep.subr.mxu0 0.0
    %805 = vmatpush1.msra.mxu0 0.0
    %806 = vmatprep.subr.mxu0 0.0
    %807 = vmatpush1.msra.mxu0 0.0
    %808 = vmatprep.subr.mxu0 0.0
    %809 = vmatpush1.msra.mxu0 0.0
    %810 = vmatprep.subr.mxu0 0.0
    %811 = vmatpush1.msra.mxu0 0.0
    %812 = vmatprep.subr.mxu0 0.0
    %813 = vmatpush1.msra.mxu0 0.0
    %814 = vmatprep.subr.mxu0 0.0
    %815 = vmatpush1.msra.mxu0 0.0
    %816 = vmatprep.subr.mxu0 0.0
    %817 = vmatpush1.msra.mxu0 0.0
    %818 = vmatprep.subr.mxu0 0.0
    %819 = vmatpush1.msra.mxu0 0.0
    %820 = vmatprep.subr.mxu0 0.0
    %821 = vmatpush1.msra.mxu0 0.0
    %822 = vmatprep.subr.mxu0 0.0
    %823 = vmatpush1.msra.mxu0 0.0
    %824 = vmatprep.subr.mxu0 0.0
    %825 = vmatpush1.msra.mxu0 0.0
    %826 = vmatprep.subr.mxu0 0.0
    %827 = vmatpush1.msra.mxu0 0.0
    %828 = vmatprep.subr.mxu0 0.0
    %829 = vmatpush1.msra.mxu0 0.0
    %830 = vmatprep.subr.mxu0 0.0
    %831 = vmatpush1.msra.mxu0 0.0
    %832 = vmatprep.subr.mxu0 0.0
    %833 = vmatpush1.msra.mxu0 0.0
    %834 = vmatprep.subr.mxu0 0.0
    %835 = vmatpush1.msra.mxu0 0.0
    %836 = vmatprep.subr.mxu0 0.0
    %837 = vmatpush1.msra.mxu0 0.0
    %838 = vmatprep.subr.mxu0 0.0
    %839 = vmatpush1.msra.mxu0 0.0
    %840 = vmatprep.mubr.f32.mxu0 0.0
    %841 = vmatmul.mubr.f32.gmra.mrb[0].mxu0 %v179
    %v842 = vpop.f32.mrb[0].mxu0
    %v843 = vadd.f32 %v775, %v842
    %v844 = vpop.f32.mrb[0].mxu0
    %845 = vmatprep.mubr.f32.mxu0 0.0
    %846 = vmatmul.mubr.f32.gmra.mrb[0].mxu0 %v182
    %v847 = vpop.f32.mrb[0].mxu0
    %v848 = vadd.f32 %v775, %v847
    %v849 = vpop.f32.mrb[0].mxu0
    %850 = vmatprep.mubr.f32.mxu0 0.0
    %851 = vmatmul.mubr.f32.gmra.mrb[0].mxu0 %v185
    %v852 = vpop.f32.mrb[0].mxu0
    %v853 = vadd.f32 %v775, %v852
    %v854 = vpop.f32.mrb[0].mxu0
    %855 = vmatprep.mubr.f32.mxu0 0.0
    %856 = vmatmul.mubr.f32.gmra.mrb[0].mxu0 %v188
    %v857 = vpop.f32.mrb[0].mxu0
    %v858 = vadd.f32 %v775, %v857
    %v859 = vpop.f32.mrb[0].mxu0
    %860 = vmatprep.mubr.f32.mxu0 0.0
    %861 = vmatmul.mubr.f32.gmra.mrb[0].mxu0 %v191
    %v862 = vpop.f32.mrb[0].mxu0
    %v863 = vadd.f32 %v775, %v862
    %v864 = vpop.f32.mrb[0].mxu0
    %865 = vmatprep.mubr.f32.mxu0 0.0
    %866 = vmatmul.mubr.f32.gmra.mrb[0].mxu0 %v194
    %v867 = vpop.f32.mrb[0].mxu0
    %v868 = vadd.f32 %v775, %v867
    %v869 = vpop.f32.mrb[0].mxu0
    %870 = vmatprep.mubr.f32.mxu0 0.0
    %871 = vmatmul.mubr.f32.gmra.mrb[0].mxu0 %v197
    %v872 = vpop.f32.mrb[0].mxu0
    %v873 = vadd.f32 %v775, %v872
    %v874 = vpop.f32.mrb[0].mxu0
    %875 = vmatprep.mubr.f32.mxu0 0.0
    %876 = vmatmul.mubr.f32.gmra.mrb[0].mxu0 %v200
    %v877 = vpop.f32.mrb[0].mxu0
    %v878 = vadd.f32 %v775, %v877
    %v879 = vpop.f32.mrb[0].mxu0
    %880 = vdwg.mxu0
    %881 = vmatprep.subr.mxu0 0.0
    %882 = vmatpush1.msra.mxu0 %v742
    %883 = vmatprep.subr.mxu0 0.0
    %884 = vmatpush1.msra.mxu0 %v747
    %885 = vmatprep.subr.mxu0 0.0
    %886 = vmatpush1.msra.mxu0 %v752
    %887 = vmatprep.subr.mxu0 0.0
    %888 = vmatpush1.msra.mxu0 %v757
    %889 = vmatprep.subr.mxu0 0.0
    %890 = vmatpush1.msra.mxu0 0.0
    %891 = vmatprep.subr.mxu0 0.0
    %892 = vmatpush1.msra.mxu0 0.0
    %893 = vmatprep.subr.mxu0 0.0
    %894 = vmatpush1.msra.mxu0 0.0
    %895 = vmatprep.subr.mxu0 0.0
    %896 = vmatpush1.msra.mxu0 0.0
    %897 = vmatprep.subr.mxu0 0.0
    %898 = vmatpush1.msra.mxu0 0.0
    %899 = vmatprep.subr.mxu0 0.0
    %900 = vmatpush1.msra.mxu0 0.0
    %901 = vmatprep.subr.mxu0 0.0
    %902 = vmatpush1.msra.mxu0 0.0
    %903 = vmatprep.subr.mxu0 0.0
    %904 = vmatpush1.msra.mxu0 0.0
    %905 = vmatprep.subr.mxu0 0.0
    %906 = vmatpush1.msra.mxu0 0.0
    %907 = vmatprep.subr.mxu0 0.0
    %908 = vmatpush1.msra.mxu0 0.0
    %909 = vmatprep.subr.mxu0 0.0
    %910 = vmatpush1.msra.mxu0 0.0
    %911 = vmatprep.subr.mxu0 0.0
    %912 = vmatpush1.msra.mxu0 0.0
    %913 = vmatprep.subr.mxu0 0.0
    %914 = vmatpush1.msra.mxu0 0.0
    %915 = vmatprep.subr.mxu0 0.0
    %916 = vmatpush1.msra.mxu0 0.0
    %917 = vmatprep.subr.mxu0 0.0
    %918 = vmatpush1.msra.mxu0 0.0
    %919 = vmatprep.subr.mxu0 0.0
    %920 = vmatpush1.msra.mxu0 0.0
    %921 = vmatprep.subr.mxu0 0.0
    %922 = vmatpush1.msra.mxu0 0.0
    %923 = vmatprep.subr.mxu0 0.0
    %924 = vmatpush1.msra.mxu0 0.0
    %925 = vmatprep.subr.mxu0 0.0
    %926 = vmatpush1.msra.mxu0 0.0
    %927 = vmatprep.subr.mxu0 0.0
    %928 = vmatpush1.msra.mxu0 0.0
    %929 = vmatprep.subr.mxu0 0.0
    %930 = vmatpush1.msra.mxu0 0.0
    %931 = vmatprep.subr.mxu0 0.0
    %932 = vmatpush1.msra.mxu0 0.0
    %933 = vmatprep.subr.mxu0 0.0
    %934 = vmatpush1.msra.mxu0 0.0
    %935 = vmatprep.subr.mxu0 0.0
    %936 = vmatpush1.msra.mxu0 0.0
    %937 = vmatprep.subr.mxu0 0.0
    %938 = vmatpush1.msra.mxu0 0.0
    %939 = vmatprep.subr.mxu0 0.0
    %940 = vmatpush1.msra.mxu0 0.0
    %941 = vmatprep.subr.mxu0 0.0
    %942 = vmatpush1.msra.mxu0 0.0
    %943 = vmatprep.subr.mxu0 0.0
    %944 = vmatpush1.msra.mxu0 0.0
    %945 = vmatprep.mubr.f32.mxu0 0.0
    %946 = vmatmul.mubr.f32.gmra.mrb[0].mxu0 %v309
    %v947 = vpop.f32.mrb[0].mxu0
    %v948 = vadd.f32 %v843, %v947
    %v949 = vpop.f32.mrb[0].mxu0
    %950 = vmatprep.mubr.f32.mxu0 0.0
    %951 = vmatmul.mubr.f32.gmra.mrb[0].mxu0 %v312
    %v952 = vpop.f32.mrb[0].mxu0
    %v953 = vadd.f32 %v848, %v952
    %v954 = vpop.f32.mrb[0].mxu0
    %955 = vmatprep.mubr.f32.mxu0 0.0
    %956 = vmatmul.mubr.f32.gmra.mrb[0].mxu0 %v315
    %v957 = vpop.f32.mrb[0].mxu0
    %v958 = vadd.f32 %v853, %v957
    %v959 = vpop.f32.mrb[0].mxu0
    %960 = vmatprep.mubr.f32.mxu0 0.0
    %961 = vmatmul.mubr.f32.gmra.mrb[0].mxu0 %v318
    %v962 = vpop.f32.mrb[0].mxu0
    %v963 = vadd.f32 %v858, %v962
    %v964 = vpop.f32.mrb[0].mxu0
    %965 = vmatprep.mubr.f32.mxu0 0.0
    %966 = vmatmul.mubr.f32.gmra.mrb[0].mxu0 %v321
    %v967 = vpop.f32.mrb[0].mxu0
    %v968 = vadd.f32 %v863, %v967
    %v969 = vpop.f32.mrb[0].mxu0
    %970 = vmatprep.mubr.f32.mxu0 0.0
    %971 = vmatmul.mubr.f32.gmra.mrb[0].mxu0 %v324
    %v972 = vpop.f32.mrb[0].mxu0
    %v973 = vadd.f32 %v868, %v972
    %v974 = vpop.f32.mrb[0].mxu0
    %975 = vmatprep.mubr.f32.mxu0 0.0
    %976 = vmatmul.mubr.f32.gmra.mrb[0].mxu0 %v327
    %v977 = vpop.f32.mrb[0].mxu0
    %v978 = vadd.f32 %v873, %v977
    %v979 = vpop.f32.mrb[0].mxu0
    %980 = vmatprep.mubr.f32.mxu0 0.0
    %981 = vmatmul.mubr.f32.gmra.mrb[0].mxu0 %v330
    %v982 = vpop.f32.mrb[0].mxu0
    %v983 = vadd.f32 %v878, %v982
    %v984 = vpop.f32.mrb[0].mxu0
    %985 = vdwg.mxu0
    %v986 = vmax.f32 %v948, 0.0
    %v987 = vmax.f32 %v953, 0.0
    %v988 = vmax.f32 %v958, 0.0
    %v989 = vmax.f32 %v963, 0.0
    %v990 = vmax.f32 %v968, 0.0
    %v991 = vmax.f32 %v973, 0.0
    %v992 = vmax.f32 %v978, 0.0
    %v993 = vmax.f32 %v983, 0.0
    %994 = vmatprep.subr.mxu0 0.0
    %995 = vmatpush1.msra.mxu0 %v986
    %996 = vmatprep.subr.mxu0 0.0
    %997 = vmatpush1.msra.mxu0 %v987
    %998 = vmatprep.subr.mxu0 0.0
    %999 = vmatpush1.msra.mxu0 %v988
    %1000 = vmatprep.subr.mxu0 0.0
    %1001 = vmatpush1.msra.mxu0 %v989
    %1002 = vmatprep.subr.mxu0 0.0
    %1003 = vmatpush1.msra.mxu0 %v990
    %1004 = vmatprep.subr.mxu0 0.0
    %1005 = vmatpush1.msra.mxu0 %v991
    %1006 = vmatprep.subr.mxu0 0.0
    %1007 = vmatpush1.msra.mxu0 %v992
    %1008 = vmatprep.subr.mxu0 0.0
    %1009 = vmatpush1.msra.mxu0 %v993
    %1010 = vmatprep.subr.mxu0 0.0
    %1011 = vmatpush1.msra.mxu0 0.0
    %1012 = vmatprep.subr.mxu0 0.0
    %1013 = vmatpush1.msra.mxu0 0.0
    %1014 = vmatprep.subr.mxu0 0.0
    %1015 = vmatpush1.msra.mxu0 0.0
    %1016 = vmatprep.subr.mxu0 0.0
    %1017 = vmatpush1.msra.mxu0 0.0
    %1018 = vmatprep.subr.mxu0 0.0
    %1019 = vmatpush1.msra.mxu0 0.0
    %1020 = vmatprep.subr.mxu0 0.0
    %1021 = vmatpush1.msra.mxu0 0.0
    %1022 = vmatprep.subr.mxu0 0.0
    %1023 = vmatpush1.msra.mxu0 0.0
    %1024 = vmatprep.subr.mxu0 0.0
    %1025 = vmatpush1.msra.mxu0 0.0
    %1026 = vmatprep.subr.mxu0 0.0
    %1027 = vmatpush1.msra.mxu0 0.0
    %1028 = vmatprep.subr.mxu0 0.0
    %1029 = vmatpush1.msra.mxu0 0.0
    %1030 = vmatprep.subr.mxu0 0.0
    %1031 = vmatpush1.msra.mxu0 0.0
    %1032 = vmatprep.subr.mxu0 0.0
    %1033 = vmatpush1.msra.mxu0 0.0
    %1034 = vmatprep.subr.mxu0 0.0
    %1035 = vmatpush1.msra.mxu0 0.0
    %1036 = vmatprep.subr.mxu0 0.0
    %1037 = vmatpush1.msra.mxu0 0.0
    %1038 = vmatprep.subr.mxu0 0.0
    %1039 = vmatpush1.msra.mxu0 0.0
    %1040 = vmatprep.subr.mxu0 0.0
    %1041 = vmatpush1.msra.mxu0 0.0
    %1042 = vmatprep.subr.mxu0 0.0
    %1043 = vmatpush1.msra.mxu0 0.0
    %1044 = vmatprep.subr.mxu0 0.0
    %1045 = vmatpush1.msra.mxu0 0.0
    %1046 = vmatprep.subr.mxu0 0.0
    %1047 = vmatpush1.msra.mxu0 0.0
    %1048 = vmatprep.subr.mxu0 0.0
    %1049 = vmatpush1.msra.mxu0 0.0
    %1050 = vmatprep.subr.mxu0 0.0
    %1051 = vmatpush1.msra.mxu0 0.0
    %1052 = vmatprep.subr.mxu0 0.0
    %1053 = vmatpush1.msra.mxu0 0.0
    %1054 = vmatprep.subr.mxu0 0.0
    %1055 = vmatpush1.msra.mxu0 0.0
    %1056 = vmatprep.subr.mxu0 0.0
    %1057 = vmatpush1.msra.mxu0 0.0
    %1058 = vmatprep.mubr.f32.mxu0 0.0
    %1059 = vmatmul.mubr.f32.gmra.mrb[0].mxu0 %v447
    %v1060 = vpop.f32.mrb[0].mxu0
    %v1061 = vadd.f32 0.0, %v1060
    %v1062 = vpop.f32.mrb[0].mxu0
    %1063 = vmatprep.mubr.f32.mxu0 0.0
    %1064 = vmatmul.mubr.f32.gmra.mrb[0].mxu0 %v450
    %v1065 = vpop.f32.mrb[0].mxu0
    %v1066 = vadd.f32 0.0, %v1065
    %v1067 = vpop.f32.mrb[0].mxu0
    %1068 = vmatprep.mubr.f32.mxu0 0.0
    %1069 = vmatmul.mubr.f32.gmra.mrb[0].mxu0 %v453
    %v1070 = vpop.f32.mrb[0].mxu0
    %v1071 = vadd.f32 0.0, %v1070
    %v1072 = vpop.f32.mrb[0].mxu0
    %1073 = vmatprep.mubr.f32.mxu0 0.0
    %1074 = vmatmul.mubr.f32.gmra.mrb[0].mxu0 %v456
    %v1075 = vpop.f32.mrb[0].mxu0
    %v1076 = vadd.f32 0.0, %v1075
    %v1077 = vpop.f32.mrb[0].mxu0
    %1078 = vdwg.mxu0
    %s1079 = sadd.f32 %s162, 1.0
    %v1080 = vstv %s1079
    %v1081 = vmul.f32 %v1080, %v742
    %v1082 = vmul.f32 %v1080, %v747
    %v1083 = vmul.f32 %v1080, %v752
    %v1084 = vmul.f32 %v1080, %v757
    %v1085 = vadd.f32 %v1081, %v1061
    %v1086 = vadd.f32 %v1082, %v1066
    %v1087 = vadd.f32 %v1083, %v1071
    %v1088 = vadd.f32 %v1084, %v1076
    %v1089 = vlaneseq
    %v1090 = vshrl.u32 %v1089, 7
    %v1091 = vsub.s32 0, %v1090
    %v1092 = vrot.slane %v766, %v1091
    %v1094 = vsel %vm307, %v1085, 0
    %v1097 = vsel %vm307, %v1086, 0
    %v1100 = vsel %vm307, %v1087, 0
    %v1103 = vsel %vm307, %v1088, 0
    %1105 = vmatprep.subr.mxu0 0.0
    %1106 = vmatpush1.msra.mxu0 %v762
    %1107 = vmatprep.subr.mxu0 0.0
    %1108 = vmatpush1.msra.mxu0 %v763
    %1109 = vmatprep.subr.mxu0 0.0
    %1110 = vmatpush1.msra.mxu0 %v764
    %1111 = vmatprep.subr.mxu0 0.0
    %1112 = vmatpush1.msra.mxu0 %v765
    %1113 = vmatprep.subr.mxu0 0.0
    %1114 = vmatpush1.msra.mxu0 0.0
    %1115 = vmatprep.subr.mxu0 0.0
    %1116 = vmatpush1.msra.mxu0 0.0
    %1117 = vmatprep.subr.mxu0 0.0
    %1118 = vmatpush1.msra.mxu0 0.0
    %1119 = vmatprep.subr.mxu0 0.0
    %1120 = vmatpush1.msra.mxu0 0.0
    %1121 = vmatprep.subr.mxu0 0.0
    %1122 = vmatpush1.msra.mxu0 0.0
    %1123 = vmatprep.subr.mxu0 0.0
    %1124 = vmatpush1.msra.mxu0 0.0
    %1125 = vmatprep.subr.mxu0 0.0
    %1126 = vmatpush1.msra.mxu0 0.0
    %1127 = vmatprep.subr.mxu0 0.0
    %1128 = vmatpush1.msra.mxu0 0.0
    %1129 = vmatprep.subr.mxu0 0.0
    %1130 = vmatpush1.msra.mxu0 0.0
    %1131 = vmatprep.subr.mxu0 0.0
    %1132 = vmatpush1.msra.mxu0 0.0
    %1133 = vmatprep.subr.mxu0 0.0
    %1134 = vmatpush1.msra.mxu0 0.0
    %1135 = vmatprep.subr.mxu0 0.0
    %1136 = vmatpush1.msra.mxu0 0.0
    %1137 = vmatprep.subr.mxu0 0.0
    %1138 = vmatpush1.msra.mxu0 0.0
    %1139 = vmatprep.subr.mxu0 0.0
    %1140 = vmatpush1.msra.mxu0 0.0
    %1141 = vmatprep.subr.mxu0 0.0
    %1142 = vmatpush1.msra.mxu0 0.0
    %1143 = vmatprep.subr.mxu0 0.0
    %1144 = vmatpush1.msra.mxu0 0.0
    %1145 = vmatprep.subr.mxu0 0.0
    %1146 = vmatpush1.msra.mxu0 0.0
    %1147 = vmatprep.subr.mxu0 0.0
    %1148 = vmatpush1.msra.mxu0 0.0
    %1149 = vmatprep.subr.mxu0 0.0
    %1150 = vmatpush1.msra.mxu0 0.0
    %1151 = vmatprep.subr.mxu0 0.0
    %1152 = vmatpush1.msra.mxu0 0.0
    %1153 = vmatprep.subr.mxu0 0.0
    %1154 = vmatpush1.msra.mxu0 0.0
    %1155 = vmatprep.subr.mxu0 0.0
    %1156 = vmatpush1.msra.mxu0 0.0
    %1157 = vmatprep.subr.mxu0 0.0
    %1158 = vmatpush1.msra.mxu0 0.0
    %1159 = vmatprep.subr.mxu0 0.0
    %1160 = vmatpush1.msra.mxu0 0.0
    %1161 = vmatprep.subr.mxu0 0.0
    %1162 = vmatpush1.msra.mxu0 0.0
    %1163 = vmatprep.subr.mxu0 0.0
    %1164 = vmatpush1.msra.mxu0 0.0
    %1165 = vmatprep.subr.mxu0 0.0
    %1166 = vmatpush1.msra.mxu0 0.0
    %1167 = vmatprep.subr.mxu0 0.0
    %1168 = vmatpush1.msra.mxu0 0.0
    %1169 = vmatprep.mubr.f32.mxu0 0.0
    %1170 = vmatmul.mubr.f32.gmra.mrb[0].mxu0 %v1094
    %v1171 = vpop.f32.mrb[0].mxu0
    %v1172 = vadd.f32 %v1092, %v1171
    %v1173 = vpop.f32.mrb[0].mxu0
    %1174 = vmatprep.mubr.f32.mxu0 0.0
    %1175 = vmatmul.mubr.f32.gmra.mrb[0].mxu0 %v1097
    %v1176 = vpop.f32.mrb[0].mxu0
    %v1177 = vadd.f32 %v1092, %v1176
    %v1178 = vpop.f32.mrb[0].mxu0
    %1179 = vmatprep.mubr.f32.mxu0 0.0
    %1180 = vmatmul.mubr.f32.gmra.mrb[0].mxu0 %v1100
    %v1181 = vpop.f32.mrb[0].mxu0
    %v1182 = vadd.f32 %v1092, %v1181
    %v1183 = vpop.f32.mrb[0].mxu0
    %1184 = vmatprep.mubr.f32.mxu0 0.0
    %1185 = vmatmul.mubr.f32.gmra.mrb[0].mxu0 %v1103
    %v1186 = vpop.f32.mrb[0].mxu0
    %v1187 = vadd.f32 %v1092, %v1186
    %v1188 = vpop.f32.mrb[0].mxu0
    %1189 = vdwg.mxu0
    %v1190 = vmax.f32 %v1172, 0.0
    %v1191 = vmax.f32 %v1177, 0.0
    %v1192 = vmax.f32 %v1182, 0.0
    %v1193 = vmax.f32 %v1187, 0.0
    %v1194 = vlaneseq
    %v1195 = vshrl.u32 %v1194, 7
    %v1196 = vsub.s32 0, %v1195
    %v1197 = vrot.slane %v771, %v1196
    %v1199 = vsel %vm307, %v1190, 0
    %v1202 = vsel %vm307, %v1191, 0
    %v1205 = vsel %vm307, %v1192, 0
    %v1208 = vsel %vm307, %v1193, 0
    %1210 = vmatprep.subr.mxu0 0.0
    %1211 = vmatpush1.msra.mxu0 %v767
    %1212 = vmatprep.subr.mxu0 0.0
    %1213 = vmatpush1.msra.mxu0 %v768
    %1214 = vmatprep.subr.mxu0 0.0
    %1215 = vmatpush1.msra.mxu0 %v769
    %1216 = vmatprep.subr.mxu0 0.0
    %1217 = vmatpush1.msra.mxu0 %v770
    %1218 = vmatprep.subr.mxu0 0.0
    %1219 = vmatpush1.msra.mxu0 0.0
    %1220 = vmatprep.subr.mxu0 0.0
    %1221 = vmatpush1.msra.mxu0 0.0
    %1222 = vmatprep.subr.mxu0 0.0
    %1223 = vmatpush1.msra.mxu0 0.0
    %1224 = vmatprep.subr.mxu0 0.0
    %1225 = vmatpush1.msra.mxu0 0.0
    %1226 = vmatprep.subr.mxu0 0.0
    %1227 = vmatpush1.msra.mxu0 0.0
    %1228 = vmatprep.subr.mxu0 0.0
    %1229 = vmatpush1.msra.mxu0 0.0
    %1230 = vmatprep.subr.mxu0 0.0
    %1231 = vmatpush1.msra.mxu0 0.0
    %1232 = vmatprep.subr.mxu0 0.0
    %1233 = vmatpush1.msra.mxu0 0.0
    %1234 = vmatprep.subr.mxu0 0.0
    %1235 = vmatpush1.msra.mxu0 0.0
    %1236 = vmatprep.subr.mxu0 0.0
    %1237 = vmatpush1.msra.mxu0 0.0
    %1238 = vmatprep.subr.mxu0 0.0
    %1239 = vmatpush1.msra.mxu0 0.0
    %1240 = vmatprep.subr.mxu0 0.0
    %1241 = vmatpush1.msra.mxu0 0.0
    %1242 = vmatprep.subr.mxu0 0.0
    %1243 = vmatpush1.msra.mxu0 0.0
    %1244 = vmatprep.subr.mxu0 0.0
    %1245 = vmatpush1.msra.mxu0 0.0
    %1246 = vmatprep.subr.mxu0 0.0
    %1247 = vmatpush1.msra.mxu0 0.0
    %1248 = vmatprep.subr.mxu0 0.0
    %1249 = vmatpush1.msra.mxu0 0.0
    %1250 = vmatprep.subr.mxu0 0.0
    %1251 = vmatpush1.msra.mxu0 0.0
    %1252 = vmatprep.subr.mxu0 0.0
    %1253 = vmatpush1.msra.mxu0 0.0
    %1254 = vmatprep.subr.mxu0 0.0
    %1255 = vmatpush1.msra.mxu0 0.0
    %1256 = vmatprep.subr.mxu0 0.0
    %1257 = vmatpush1.msra.mxu0 0.0
    %1258 = vmatprep.subr.mxu0 0.0
    %1259 = vmatpush1.msra.mxu0 0.0
    %1260 = vmatprep.subr.mxu0 0.0
    %1261 = vmatpush1.msra.mxu0 0.0
    %1262 = vmatprep.subr.mxu0 0.0
    %1263 = vmatpush1.msra.mxu0 0.0
    %1264 = vmatprep.subr.mxu0 0.0
    %1265 = vmatpush1.msra.mxu0 0.0
    %1266 = vmatprep.subr.mxu0 0.0
    %1267 = vmatpush1.msra.mxu0 0.0
    %1268 = vmatprep.subr.mxu0 0.0
    %1269 = vmatpush1.msra.mxu0 0.0
    %1270 = vmatprep.subr.mxu0 0.0
    %1271 = vmatpush1.msra.mxu0 0.0
    %1272 = vmatprep.subr.mxu0 0.0
    %1273 = vmatpush1.msra.mxu0 0.0
    %1274 = vmatprep.mubr.f32.mxu0 0.0
    %1275 = vmatmul.mubr.f32.gmra.mrb[0].mxu0 %v1199
    %v1276 = vpop.f32.mrb[0].mxu0
    %v1277 = vadd.f32 %v1197, %v1276
    %v1278 = vpop.f32.mrb[0].mxu0
    %1279 = vmatprep.mubr.f32.mxu0 0.0
    %1280 = vmatmul.mubr.f32.gmra.mrb[0].mxu0 %v1202
    %v1281 = vpop.f32.mrb[0].mxu0
    %v1282 = vadd.f32 %v1197, %v1281
    %v1283 = vpop.f32.mrb[0].mxu0
    %1284 = vmatprep.mubr.f32.mxu0 0.0
    %1285 = vmatmul.mubr.f32.gmra.mrb[0].mxu0 %v1205
    %v1286 = vpop.f32.mrb[0].mxu0
    %v1287 = vadd.f32 %v1197, %v1286
    %v1288 = vpop.f32.mrb[0].mxu0
    %1289 = vmatprep.mubr.f32.mxu0 0.0
    %1290 = vmatmul.mubr.f32.gmra.mrb[0].mxu0 %v1208
    %v1291 = vpop.f32.mrb[0].mxu0
    %v1292 = vadd.f32 %v1197, %v1291
    %v1293 = vpop.f32.mrb[0].mxu0
    %1294 = vdwg.mxu0
    %v1295 = vadd.f32 %v742, %v1277
    %v1296 = vadd.f32 %v747, %v1282
    %v1297 = vadd.f32 %v752, %v1287
    %v1298 = vadd.f32 %v757, %v1292
    %v1300 = vsel %vm307, %v154, 0
    %1302 = vmatprep.subr.mxu0 0.0
    %1303 = vmatpush1.msra.mxu0 %v1295
    %1304 = vmatprep.subr.mxu0 0.0
    %1305 = vmatpush1.msra.mxu0 %v1296
    %1306 = vmatprep.subr.mxu0 0.0
    %1307 = vmatpush1.msra.mxu0 %v1297
    %1308 = vmatprep.subr.mxu0 0.0
    %1309 = vmatpush1.msra.mxu0 %v1298
    %1310 = vmatprep.subr.mxu0 0.0
    %1311 = vmatpush1.msra.mxu0 0.0
    %1312 = vmatprep.subr.mxu0 0.0
    %1313 = vmatpush1.msra.mxu0 0.0
    %1314 = vmatprep.subr.mxu0 0.0
    %1315 = vmatpush1.msra.mxu0 0.0
    %1316 = vmatprep.subr.mxu0 0.0
    %1317 = vmatpush1.msra.mxu0 0.0
    %1318 = vmatprep.subr.mxu0 0.0
    %1319 = vmatpush1.msra.mxu0 0.0
    %1320 = vmatprep.subr.mxu0 0.0
    %1321 = vmatpush1.msra.mxu0 0.0
    %1322 = vmatprep.subr.mxu0 0.0
    %1323 = vmatpush1.msra.mxu0 0.0
    %1324 = vmatprep.subr.mxu0 0.0
    %1325 = vmatpush1.msra.mxu0 0.0
    %1326 = vmatprep.subr.mxu0 0.0
    %1327 = vmatpush1.msra.mxu0 0.0
    %1328 = vmatprep.subr.mxu0 0.0
    %1329 = vmatpush1.msra.mxu0 0.0
    %1330 = vmatprep.subr.mxu0 0.0
    %1331 = vmatpush1.msra.mxu0 0.0
    %1332 = vmatprep.subr.mxu0 0.0
    %1333 = vmatpush1.msra.mxu0 0.0
    %1334 = vmatprep.subr.mxu0 0.0
    %1335 = vmatpush1.msra.mxu0 0.0
    %1336 = vmatprep.subr.mxu0 0.0
    %1337 = vmatpush1.msra.mxu0 0.0
    %1338 = vmatprep.subr.mxu0 0.0
    %1339 = vmatpush1.msra.mxu0 0.0
    %1340 = vmatprep.subr.mxu0 0.0
    %1341 = vmatpush1.msra.mxu0 0.0
    %1342 = vmatprep.subr.mxu0 0.0
    %1343 = vmatpush1.msra.mxu0 0.0
    %1344 = vmatprep.subr.mxu0 0.0
    %1345 = vmatpush1.msra.mxu0 0.0
    %1346 = vmatprep.subr.mxu0 0.0
    %1347 = vmatpush1.msra.mxu0 0.0
    %1348 = vmatprep.subr.mxu0 0.0
    %1349 = vmatpush1.msra.mxu0 0.0
    %1350 = vmatprep.subr.mxu0 0.0
    %1351 = vmatpush1.msra.mxu0 0.0
    %1352 = vmatprep.subr.mxu0 0.0
    %1353 = vmatpush1.msra.mxu0 0.0
    %1354 = vmatprep.subr.mxu0 0.0
    %1355 = vmatpush1.msra.mxu0 0.0
    %1356 = vmatprep.subr.mxu0 0.0
    %1357 = vmatpush1.msra.mxu0 0.0
    %1358 = vmatprep.subr.mxu0 0.0
    %1359 = vmatpush1.msra.mxu0 0.0
    %1360 = vmatprep.subr.mxu0 0.0
    %1361 = vmatpush1.msra.mxu0 0.0
    %1362 = vmatprep.subr.mxu0 0.0
    %1363 = vmatpush1.msra.mxu0 0.0
    %1364 = vmatprep.subr.mxu0 0.0
    %1365 = vmatpush1.msra.mxu0 0.0
    %1366 = vmatprep.mubr.f32.mxu0 0.0
    %1367 = vmatmul.mubr.f32.gmra.mrb[0].mxu0 %v1300
    %v1368 = vpop.f32.mrb[0].mxu0
    %v1369 = vadd.f32 0.0, %v1368
    %v1370 = vpop.f32.mrb[0].mxu0
    %1371 = vdwg.mxu0
    %v1373 = vsel %vm307, %v160, 0
    %1375 = vmatprep.subr.mxu0 0.0
    %1376 = vmatpush1.msra.mxu0 %v1295
    %1377 = vmatprep.subr.mxu0 0.0
    %1378 = vmatpush1.msra.mxu0 %v1296
    %1379 = vmatprep.subr.mxu0 0.0
    %1380 = vmatpush1.msra.mxu0 %v1297
    %1381 = vmatprep.subr.mxu0 0.0
    %1382 = vmatpush1.msra.mxu0 %v1298
    %1383 = vmatprep.subr.mxu0 0.0
    %1384 = vmatpush1.msra.mxu0 0.0
    %1385 = vmatprep.subr.mxu0 0.0
    %1386 = vmatpush1.msra.mxu0 0.0
    %1387 = vmatprep.subr.mxu0 0.0
    %1388 = vmatpush1.msra.mxu0 0.0
    %1389 = vmatprep.subr.mxu0 0.0
    %1390 = vmatpush1.msra.mxu0 0.0
    %1391 = vmatprep.subr.mxu0 0.0
    %1392 = vmatpush1.msra.mxu0 0.0
    %1393 = vmatprep.subr.mxu0 0.0
    %1394 = vmatpush1.msra.mxu0 0.0
    %1395 = vmatprep.subr.mxu0 0.0
    %1396 = vmatpush1.msra.mxu0 0.0
    %1397 = vmatprep.subr.mxu0 0.0
    %1398 = vmatpush1.msra.mxu0 0.0
    %1399 = vmatprep.subr.mxu0 0.0
    %1400 = vmatpush1.msra.mxu0 0.0
    %1401 = vmatprep.subr.mxu0 0.0
    %1402 = vmatpush1.msra.mxu0 0.0
    %1403 = vmatprep.subr.mxu0 0.0
    %1404 = vmatpush1.msra.mxu0 0.0
    %1405 = vmatprep.subr.mxu0 0.0
    %1406 = vmatpush1.msra.mxu0 0.0
    %1407 = vmatprep.subr.mxu0 0.0
    %1408 = vmatpush1.msra.mxu0 0.0
    %1409 = vmatprep.subr.mxu0 0.0
    %1410 = vmatpush1.msra.mxu0 0.0
    %1411 = vmatprep.subr.mxu0 0.0
    %1412 = vmatpush1.msra.mxu0 0.0
    %1413 = vmatprep.subr.mxu0 0.0
    %1414 = vmatpush1.msra.mxu0 0.0
    %1415 = vmatprep.subr.mxu0 0.0
    %1416 = vmatpush1.msra.mxu0 0.0
    %1417 = vmatprep.subr.mxu0 0.0
    %1418 = vmatpush1.msra.mxu0 0.0
    %1419 = vmatprep.subr.mxu0 0.0
    %1420 = vmatpush1.msra.mxu0 0.0
    %1421 = vmatprep.subr.mxu0 0.0
    %1422 = vmatpush1.msra.mxu0 0.0
    %1423 = vmatprep.subr.mxu0 0.0
    %1424 = vmatpush1.msra.mxu0 0.0
    %1425 = vmatprep.subr.mxu0 0.0
    %1426 = vmatpush1.msra.mxu0 0.0
    %1427 = vmatprep.subr.mxu0 0.0
    %1428 = vmatpush1.msra.mxu0 0.0
    %1429 = vmatprep.subr.mxu0 0.0
    %1430 = vmatpush1.msra.mxu0 0.0
    %1431 = vmatprep.subr.mxu0 0.0
    %1432 = vmatpush1.msra.mxu0 0.0
    %1433 = vmatprep.subr.mxu0 0.0
    %1434 = vmatpush1.msra.mxu0 0.0
    %1435 = vmatprep.subr.mxu0 0.0
    %1436 = vmatpush1.msra.mxu0 0.0
    %1437 = vmatprep.subr.mxu0 0.0
    %1438 = vmatpush1.msra.mxu0 0.0
    %1439 = vmatprep.mubr.f32.mxu0 0.0
    %1440 = vmatmul.mubr.f32.gmra.mrb[0].mxu0 %v1373
    %v1441 = vpop.f32.mrb[0].mxu0
    %v1442 = vadd.f32 0.0, %v1441
    %v1443 = vpop.f32.mrb[0].mxu0
    %1444 = vdwg.mxu0
    %v1445 = vld [vmem:[%s5 + $0xb0] sm:$0xff]
    %v1446 = vld [vmem:[%s5 + $0xb8] sm:$0xff]
    %v1447 = vld [vmem:[%s5 + $0xc0] sm:$0xff]
    %v1448 = vld [vmem:[%s5 + $0xc8] sm:$0xff]
    %v1449 = vld [vmem:[%s5 + $0xd0] sm:$0xff]
    %v1450 = vld [vmem:[%s5 + $0xd8] sm:$0xff]
    %v1451 = vld [vmem:[%s5 + $0xe0] sm:$0xff]
    %v1452 = vld [vmem:[%s5 + $0xe8] sm:$0xff]
    %v1454 = vsel %vm307, %v1442, 0
    %1456 = vmatprep.subr.mxu0 0.0
    %1457 = vmatpush1.msra.mxu0 %v1449
    %1458 = vmatprep.subr.mxu0 0.0
    %1459 = vmatpush1.msra.mxu0 %v1450
    %1460 = vmatprep.subr.mxu0 0.0
    %1461 = vmatpush1.msra.mxu0 %v1451
    %1462 = vmatprep.subr.mxu0 0.0
    %1463 = vmatpush1.msra.mxu0 %v1452
    %1464 = vmatprep.subr.mxu0 0.0
    %1465 = vmatpush1.msra.mxu0 0.0
    %1466 = vmatprep.subr.mxu0 0.0
    %1467 = vmatpush1.msra.mxu0 0.0
    %1468 = vmatprep.subr.mxu0 0.0
    %1469 = vmatpush1.msra.mxu0 0.0
    %1470 = vmatprep.subr.mxu0 0.0
    %1471 = vmatpush1.msra.mxu0 0.0
    %1472 = vmatprep.subr.mxu0 0.0
    %1473 = vmatpush1.msra.mxu0 0.0
    %1474 = vmatprep.subr.mxu0 0.0
    %1475 = vmatpush1.msra.mxu0 0.0
    %1476 = vmatprep.subr.mxu0 0.0
    %1477 = vmatpush1.msra.mxu0 0.0
    %1478 = vmatprep.subr.mxu0 0.0
    %1479 = vmatpush1.msra.mxu0 0.0
    %1480 = vmatprep.subr.mxu0 0.0
    %1481 = vmatpush1.msra.mxu0 0.0
    %1482 = vmatprep.subr.mxu0 0.0
    %1483 = vmatpush1.msra.mxu0 0.0
    %1484 = vmatprep.subr.mxu0 0.0
    %1485 = vmatpush1.msra.mxu0 0.0
    %1486 = vmatprep.subr.mxu0 0.0
    %1487 = vmatpush1.msra.mxu0 0.0
    %1488 = vmatprep.subr.mxu0 0.0
    %1489 = vmatpush1.msra.mxu0 0.0
    %1490 = vmatprep.subr.mxu0 0.0
    %1491 = vmatpush1.msra.mxu0 0.0
    %1492 = vmatprep.subr.mxu0 0.0
    %1493 = vmatpush1.msra.mxu0 0.0
    %1494 = vmatprep.subr.mxu0 0.0
    %1495 = vmatpush1.msra.mxu0 0.0
    %1496 = vmatprep.subr.mxu0 0.0
    %1497 = vmatpush1.msra.mxu0 0.0
    %1498 = vmatprep.subr.mxu0 0.0
    %1499 = vmatpush1.msra.mxu0 0.0
    %1500 = vmatprep.subr.mxu0 0.0
    %1501 = vmatpush1.msra.mxu0 0.0
    %1502 = vmatprep.subr.mxu0 0.0
    %1503 = vmatpush1.msra.mxu0 0.0
    %1504 = vmatprep.subr.mxu0 0.0
    %1505 = vmatpush1.msra.mxu0 0.0
    %1506 = vmatprep.subr.mxu0 0.0
    %1507 = vmatpush1.msra.mxu0 0.0
    %1508 = vmatprep.subr.mxu0 0.0
    %1509 = vmatpush1.msra.mxu0 0.0
    %1510 = vmatprep.subr.mxu0 0.0
    %1511 = vmatpush1.msra.mxu0 0.0
    %1512 = vmatprep.subr.mxu0 0.0
    %1513 = vmatpush1.msra.mxu0 0.0
    %1514 = vmatprep.subr.mxu0 0.0
    %1515 = vmatpush1.msra.mxu0 0.0
    %1516 = vmatprep.subr.mxu0 0.0
    %1517 = vmatpush1.msra.mxu0 0.0
    %1518 = vmatprep.subr.mxu0 0.0
    %1519 = vmatpush1.msra.mxu0 0.0
    %1520 = vmatprep.mubr.f32.mxu0 0.0
    %1521 = vmatmul.mubr.f32.gmra.mrb[0].mxu0 %v1454
    %v1522 = vpop.f32.mrb[0].mxu0
    %v1523 = vadd.f32 0.0, %v1522
    %v1524 = vpop.f32.mrb[0].mxu0
    %1525 = vdwg.mxu0
    %v1527 = vsel %vm307, %v1369, 0
    %1529 = vmatprep.subr.mxu0 0.0
    %1530 = vmatpush1.msra.mxu0 %v1445
    %1531 = vmatprep.subr.mxu0 0.0
    %1532 = vmatpush1.msra.mxu0 %v1446
    %1533 = vmatprep.subr.mxu0 0.0
    %1534 = vmatpush1.msra.mxu0 %v1447
    %1535 = vmatprep.subr.mxu0 0.0
    %1536 = vmatpush1.msra.mxu0 %v1448
    %1537 = vmatprep.subr.mxu0 0.0
    %1538 = vmatpush1.msra.mxu0 0.0
    %1539 = vmatprep.subr.mxu0 0.0
    %1540 = vmatpush1.msra.mxu0 0.0
    %1541 = vmatprep.subr.mxu0 0.0
    %1542 = vmatpush1.msra.mxu0 0.0
    %1543 = vmatprep.subr.mxu0 0.0
    %1544 = vmatpush1.msra.mxu0 0.0
    %1545 = vmatprep.subr.mxu0 0.0
    %1546 = vmatpush1.msra.mxu0 0.0
    %1547 = vmatprep.subr.mxu0 0.0
    %1548 = vmatpush1.msra.mxu0 0.0
    %1549 = vmatprep.subr.mxu0 0.0
    %1550 = vmatpush1.msra.mxu0 0.0
    %1551 = vmatprep.subr.mxu0 0.0
    %1552 = vmatpush1.msra.mxu0 0.0
    %1553 = vmatprep.subr.mxu0 0.0
    %1554 = vmatpush1.msra.mxu0 0.0
    %1555 = vmatprep.subr.mxu0 0.0
    %1556 = vmatpush1.msra.mxu0 0.0
    %1557 = vmatprep.subr.mxu0 0.0
    %1558 = vmatpush1.msra.mxu0 0.0
    %1559 = vmatprep.subr.mxu0 0.0
    %1560 = vmatpush1.msra.mxu0 0.0
    %1561 = vmatprep.subr.mxu0 0.0
    %1562 = vmatpush1.msra.mxu0 0.0
    %1563 = vmatprep.subr.mxu0 0.0
    %1564 = vmatpush1.msra.mxu0 0.0
    %1565 = vmatprep.subr.mxu0 0.0
    %1566 = vmatpush1.msra.mxu0 0.0
    %1567 = vmatprep.subr.mxu0 0.0
    %1568 = vmatpush1.msra.mxu0 0.0
    %1569 = vmatprep.subr.mxu0 0.0
    %1570 = vmatpush1.msra.mxu0 0.0
    %1571 = vmatprep.subr.mxu0 0.0
    %1572 = vmatpush1.msra.mxu0 0.0
    %1573 = vmatprep.subr.mxu0 0.0
    %1574 = vmatpush1.msra.mxu0 0.0
    %1575 = vmatprep.subr.mxu0 0.0
    %1576 = vmatpush1.msra.mxu0 0.0
    %1577 = vmatprep.subr.mxu0 0.0
    %1578 = vmatpush1.msra.mxu0 0.0
    %1579 = vmatprep.subr.mxu0 0.0
    %1580 = vmatpush1.msra.mxu0 0.0
    %1581 = vmatprep.subr.mxu0 0.0
    %1582 = vmatpush1.msra.mxu0 0.0
    %1583 = vmatprep.subr.mxu0 0.0
    %1584 = vmatpush1.msra.mxu0 0.0
    %1585 = vmatprep.subr.mxu0 0.0
    %1586 = vmatpush1.msra.mxu0 0.0
    %1587 = vmatprep.subr.mxu0 0.0
    %1588 = vmatpush1.msra.mxu0 0.0
    %1589 = vmatprep.subr.mxu0 0.0
    %1590 = vmatpush1.msra.mxu0 0.0
    %1591 = vmatprep.subr.mxu0 0.0
    %1592 = vmatpush1.msra.mxu0 0.0
    %1593 = vmatprep.mubr.f32.mxu0 0.0
    %1594 = vmatmul.mubr.f32.gmra.mrb[0].mxu0 %v1527
    %v1595 = vpop.f32.mrb[0].mxu0
    %v1596 = vadd.f32 %v1523, %v1595
    %v1597 = vpop.f32.mrb[0].mxu0
    %1598 = vdwg.mxu0
    %v1599 = vld [vmem:[%s5 + $0xf0] sm:$0x1]
    %v1600 = vlaneseq
    %v1601 = vshrl.u32 %v1600, 7
    %v1602 = vsub.s32 0, %v1601
    %v1603 = vrot.slane %v1599, %v1602
    %v1604 = vadd.f32 %v1596, %v1603
    %v1605 = vmax.f32 %v1604, 0.0
    %v1606 = vld [vmem:[%s5 + $0xf8] sm:$0xff]
    %v1607 = vld [vmem:[%s5 + $0x100] sm:$0xff]
    %v1608 = vld [vmem:[%s5 + $0x108] sm:$0xff]
    %v1609 = vld [vmem:[%s5 + $0x110] sm:$0xff]
    %v1610 = vld [vmem:[%s5 + $0x118] sm:$0xff]
    %v1611 = vld [vmem:[%s5 + $0x120] sm:$0xff]
    %v1612 = vld [vmem:[%s5 + $0x128] sm:$0xff]
    %v1613 = vld [vmem:[%s5 + $0x130] sm:$0xff]
    %v1614 = vld [vmem:[%s5 + $0x138] sm:$0x1]
    %v1615 = vlaneseq
    %v1616 = vshrl.u32 %v1615, 7
    %v1617 = vsub.s32 0, %v1616
    %v1618 = vrot.slane %v1614, %v1617
    %v1620 = vsel %vm445, %v1605, 0
    %1622 = vmatprep.subr.mxu0 0.0
    %1623 = vmatpush1.msra.mxu0 %v1606
    %1624 = vmatprep.subr.mxu0 0.0
    %1625 = vmatpush1.msra.mxu0 %v1607
    %1626 = vmatprep.subr.mxu0 0.0
    %1627 = vmatpush1.msra.mxu0 %v1608
    %1628 = vmatprep.subr.mxu0 0.0
    %1629 = vmatpush1.msra.mxu0 %v1609
    %1630 = vmatprep.subr.mxu0 0.0
    %1631 = vmatpush1.msra.mxu0 %v1610
    %1632 = vmatprep.subr.mxu0 0.0
    %1633 = vmatpush1.msra.mxu0 %v1611
    %1634 = vmatprep.subr.mxu0 0.0
    %1635 = vmatpush1.msra.mxu0 %v1612
    %1636 = vmatprep.subr.mxu0 0.0
    %1637 = vmatpush1.msra.mxu0 %v1613
    %1638 = vmatprep.subr.mxu0 0.0
    %1639 = vmatpush1.msra.mxu0 0.0
    %1640 = vmatprep.subr.mxu0 0.0
    %1641 = vmatpush1.msra.mxu0 0.0
    %1642 = vmatprep.subr.mxu0 0.0
    %1643 = vmatpush1.msra.mxu0 0.0
    %1644 = vmatprep.subr.mxu0 0.0
    %1645 = vmatpush1.msra.mxu0 0.0
    %1646 = vmatprep.subr.mxu0 0.0
    %1647 = vmatpush1.msra.mxu0 0.0
    %1648 = vmatprep.subr.mxu0 0.0
    %1649 = vmatpush1.msra.mxu0 0.0
    %1650 = vmatprep.subr.mxu0 0.0
    %1651 = vmatpush1.msra.mxu0 0.0
    %1652 = vmatprep.subr.mxu0 0.0
    %1653 = vmatpush1.msra.mxu0 0.0
    %1654 = vmatprep.subr.mxu0 0.0
    %1655 = vmatpush1.msra.mxu0 0.0
    %1656 = vmatprep.subr.mxu0 0.0
    %1657 = vmatpush1.msra.mxu0 0.0
    %1658 = vmatprep.subr.mxu0 0.0
    %1659 = vmatpush1.msra.mxu0 0.0
    %1660 = vmatprep.subr.mxu0 0.0
    %1661 = vmatpush1.msra.mxu0 0.0
    %1662 = vmatprep.subr.mxu0 0.0
    %1663 = vmatpush1.msra.mxu0 0.0
    %1664 = vmatprep.subr.mxu0 0.0
    %1665 = vmatpush1.msra.mxu0 0.0
    %1666 = vmatprep.subr.mxu0 0.0
    %1667 = vmatpush1.msra.mxu0 0.0
    %1668 = vmatprep.subr.mxu0 0.0
    %1669 = vmatpush1.msra.mxu0 0.0
    %1670 = vmatprep.subr.mxu0 0.0
    %1671 = vmatpush1.msra.mxu0 0.0
    %1672 = vmatprep.subr.mxu0 0.0
    %1673 = vmatpush1.msra.mxu0 0.0
    %1674 = vmatprep.subr.mxu0 0.0
    %1675 = vmatpush1.msra.mxu0 0.0
    %1676 = vmatprep.subr.mxu0 0.0
    %1677 = vmatpush1.msra.mxu0 0.0
    %1678 = vmatprep.subr.mxu0 0.0
    %1679 = vmatpush1.msra.mxu0 0.0
    %1680 = vmatprep.subr.mxu0 0.0
    %1681 = vmatpush1.msra.mxu0 0.0
    %1682 = vmatprep.subr.mxu0 0.0
    %1683 = vmatpush1.msra.mxu0 0.0
    %1684 = vmatprep.subr.mxu0 0.0
    %1685 = vmatpush1.msra.mxu0 0.0
    %1686 = vmatprep.mubr.f32.mxu0 0.0
    %1687 = vmatmul.mubr.f32.gmra.mrb[0].mxu0 %v1620
    %v1688 = vpop.f32.mrb[0].mxu0
    %v1689 = vadd.f32 %v1618, %v1688
    %v1690 = vpop.f32.mrb[0].mxu0
    %1691 = vdwg.mxu0
    %vm1692 = vcmask 9216
    %v1693 = vsel %vm1692, %v1689, -inf
    %1694 = vmax.xlane.f32.xlu0 %v1693
    %v1695 = vpop.xlane.xlu0 %1694
    %v1696 = vsub.f32 %v1689, %v1695
    %v1697 = vmul.f32 %v1696, 1.442695
    %v1698 = vpow.pop %v1697
    %v1699 = vsel %vm1692, %v1698, 0.0
    %1700 = vadd.xlane.f32.xlu0 %v1699
    %v1701 = vpop.xlane.xlu0 %1700
    %v1702 = vrcp.pop %v1701
    %v1703 = vmul.f32 %v1698, %v1702
    %1704 = vst.msk [vmem:[#allocation5] sm:$0x3] %vm1692, %v1703
    // Predicated region
    $region34: #{graph_classifier.1} parent=1 // pred_check
      _
    $region35: #{graph_classifier.1} parent=1 // pred_check_branch
      %1706 = sbr.rel (0) target = $region37
    $region36: #{graph_classifier.1} parent=1 // pred_region
      %s1708 = ssub.s32 32, 32
      %1709 = vsyncadd [#allocation3], %s1708
      %s1711 = sshll.u32 [#allocation5], 4
      %s1712 = int_to_ptr.vmem [resolvable:$true] %s1711
      %1714 = dma.vmem_to_hbm [thread:$0]  %s1712, 32, %s7, [#allocation3]
    $region37: #{graph_classifier.1} parent=1 // pred_fallthru
      _
    // Predicated region
    $region38: #{graph_classifier.1} parent=1 // pred_check
      _
    $region39: #{graph_classifier.1} parent=1 // pred_check_branch
      %1716 = sbr.rel (0) target = $region41
    $region40: #{graph_classifier.1} parent=1 // pred_region
      %1717 = dma.done [#allocation3], 32
    $region41: #{graph_classifier.1} parent=1 // pred_fallthru
      _
    %1718 = vsyncpa [#allocation3], 1
    %1719 = vsyncpa [#allocation4], 1

</llo_original>
